<compile_context>
chip_gen: v7x
topology: tpu7x:2x2x1
jax: 0.10.0
libtpu: 0.0.40
codegen_flags: <defaults>
</compile_context>

<pallas_src>
import numpy as np
import jax
import jax.numpy as jnp
from jax import lax
from jax.experimental import pallas as pl
from jax.experimental.pallas import tpu as pltpu

# ----------------------------- configuration --------------------------------
VOCAB_SIZE   = 50
EMBEDS_DIM   = 64          # token embedding dim (stand-in for GloVe 300)
HIDDEN_DIM   = 32          # LSTM hidden per direction
LSTM_OUT     = 2 * HIDDEN_DIM
DISTANCE_DIM = 20
GENRE_DIM    = 20
SPEAKER_DIM  = 20
MLP_HIDDEN   = 150
GI_DIM       = 2 * LSTM_OUT + EMBEDS_DIM + DISTANCE_DIM             # 212
GIJ_DIM      = GI_DIM * 3 + DISTANCE_DIM + GENRE_DIM + SPEAKER_DIM  # 696
BINS         = [1, 2, 3, 4, 5, 8, 16, 32, 64]
GENRES       = ['bc', 'bn', 'mz', 'nw', 'pt', 'tc', 'wb']
G_TO_I       = {g: i + 1 for i, g in enumerate(GENRES)}
MAX_SPAN_WIDTH = 3

HID_PAD = 256              # 150 -> 256 (multiple of 128 MXU tiles)
OUT_PAD = 128              # scorer output padded to a full lane (sliced to 1)

_VMEM = pl.BlockSpec(memory_space=pltpu.MemorySpace.VMEM)


def _round_up(x, m):
    return ((x + m - 1) // m) * m


# ------------------------------ Pallas kernels -------------------------------
def _mlp3_body(x_ref, w1_ref, b1_ref, w2_ref, b2_ref, w3_ref, b3_ref):
    # Linear -> ReLU -> Linear -> ReLU -> Linear (nn.Sequential in `mlp`).
    # Matmul operands are bf16 (MXU native); accumulation / bias / ReLU in f32.
    h1 = jnp.dot(x_ref[...], w1_ref[...],
                 preferred_element_type=jnp.float32) + b1_ref[...]
    h1 = jnp.maximum(h1, 0.0).astype(jnp.bfloat16)
    h2 = jnp.dot(h1, w2_ref[...],
                 preferred_element_type=jnp.float32) + b2_ref[...]
    h2 = jnp.maximum(h2, 0.0).astype(jnp.bfloat16)
    return jnp.dot(h2, w3_ref[...],
                   preferred_element_type=jnp.float32) + b3_ref[...]


def _mlp3_kernel(x_ref, w1_ref, b1_ref, w2_ref, b2_ref, w3_ref, b3_ref, o_ref):
    o_ref[...] = _mlp3_body(x_ref, w1_ref, b1_ref, w2_ref, b2_ref, w3_ref, b3_ref)


def _mlp3_add_kernel(x_ref, w1_ref, b1_ref, w2_ref, b2_ref, w3_ref, b3_ref,
                     add_ref, o_ref):
    # Fused s_i + s_j add (rides in a VALU slot under the matmuls).
    o_ref[...] = (_mlp3_body(x_ref, w1_ref, b1_ref, w2_ref, b2_ref,
                             w3_ref, b3_ref) + add_ref[...])


def mlp3(x, p, extra_add=None, tm_max=256):
    """Row-tiled 3-layer MLP. Returns [n, 1] f32 (lane-dense padded inside)."""
    n, d = x.shape
    d_pad = p['in_pad']
    tm = min(tm_max, _round_up(n, 32))
    n_pad = _round_up(n, tm)

    x_p = jnp.zeros((n_pad, d_pad), jnp.float32).at[:n, :d].set(x)
    x_p = x_p.astype(jnp.bfloat16)

    def w_spec(shape):
        return pl.BlockSpec(shape, lambda i: (0, 0))

    in_specs = [pl.BlockSpec((tm, d_pad), lambda i: (i, 0)),
                w_spec((d_pad, HID_PAD)), w_spec((1, HID_PAD)),
                w_spec((HID_PAD, HID_PAD)), w_spec((1, HID_PAD)),
                w_spec((HID_PAD, OUT_PAD)), w_spec((1, OUT_PAD))]
    args = [x_p, p['w1'], p['b1'], p['w2'], p['b2'], p['w3'], p['b3']]

    if extra_add is not None:
        add_p = jnp.zeros((n_pad, 1), jnp.float32).at[:n, :].set(extra_add)
        in_specs.append(pl.BlockSpec((tm, 1), lambda i: (i, 0)))
        args.append(add_p)
        kernel = _mlp3_add_kernel
    else:
        kernel = _mlp3_kernel

    out = pl.pallas_call(
        kernel,
        out_shape=jax.ShapeDtypeStruct((n_pad, OUT_PAD), jnp.float32),
        grid=(n_pad // tm,),
        in_specs=in_specs,
        out_specs=pl.BlockSpec((tm, OUT_PAD), lambda i: (i, 0)),
        compiler_params=pltpu.CompilerParams(
            dimension_semantics=("parallel",)),
    )(*args)
    return out[:n, :1]


def _lstm_cell(gates, c, H):
    i = jax.nn.sigmoid(gates[:, 0:H])
    f = jax.nn.sigmoid(gates[:, H:2 * H])
    g = jnp.tanh(gates[:, 2 * H:3 * H])
    o = jax.nn.sigmoid(gates[:, 3 * H:4 * H])
    c = f * c + i * g
    h = o * jnp.tanh(c)
    return h, c


def _make_bilstm_kernel(B, T, H):
    """One bidirectional LSTM layer over all sentences, time-major rows.
    B is the sublane-padded batch (multiple of 8) so every per-step slice and
    store is (8,·) aligned."""
    def kernel(xf_ref, xb_ref,
               wf_ih_ref, wf_hh_ref, bf_ref,
               wb_ih_ref, wb_hh_ref, bb_ref,
               of_ref, ob_ref):
        # Hoisted input projections: one [T*B, d_in] @ [d_in, 4H] per direction.
        gx_f = jnp.dot(xf_ref[...], wf_ih_ref[...],
                       preferred_element_type=jnp.float32) + bf_ref[...]
        gx_b = jnp.dot(xb_ref[...], wb_ih_ref[...],
                       preferred_element_type=jnp.float32) + bb_ref[...]
        whh_f = wf_hh_ref[...]
        whh_b = wb_hh_ref[...]

        hf = jnp.zeros((B, H), jnp.float32)
        cf = jnp.zeros((B, H), jnp.float32)
        hb = jnp.zeros((B, H), jnp.float32)
        cb = jnp.zeros((B, H), jnp.float32)
        hs_f, hs_b = [], []
        for t in range(T):  # T is small & static -> fully unrolled
            gf = gx_f[t * B:(t + 1) * B, :] + jnp.dot(
                hf.astype(jnp.bfloat16), whh_f,
                preferred_element_type=jnp.float32)
            hf, cf = _lstm_cell(gf, cf, H)
            hs_f.append(hf)

            gb = gx_b[t * B:(t + 1) * B, :] + jnp.dot(
                hb.astype(jnp.bfloat16), whh_b,
                preferred_element_type=jnp.float32)
            hb, cb = _lstm_cell(gb, cb, H)
            hs_b.append(hb)
        # single aligned store per direction instead of T small masked stores
        of_ref[...] = jnp.concatenate(hs_f, axis=0)
        ob_ref[...] = jnp.concatenate(hs_b, axis=0)
    return kernel


def bilstm_encode_all(sent_embeds, lstm_params):
    """2-layer biLSTM over all sentences (packed-seq semantics, zero init)."""
    lens = [int(e.shape[0]) for e in sent_embeds]
    B, Tmax, H = len(lens), max(lens), HIDDEN_DIM
    B_pad = _round_up(max(B, 1), 8)

    def to_time_major(arr_list):
        stacked = jnp.stack([jnp.pad(a, ((0, Tmax - a.shape[0]), (0, 0)))
                             for a in arr_list])              # [B, Tmax, D]
        if B_pad > B:
            stacked = jnp.pad(stacked, ((0, B_pad - B), (0, 0), (0, 0)))
        return jnp.transpose(stacked, (1, 0, 2)).reshape(Tmax * B_pad, -1)

    h_list = list(sent_embeds)
    for layer in range(2):
        xf = to_time_major(h_list).astype(jnp.bfloat16)
        xb = to_time_major([h[::-1] for h in h_list]).astype(jnp.bfloat16)
        fwd_p, bwd_p = lstm_params[layer]
        of, ob = pl.pallas_call(
            _make_bilstm_kernel(B_pad, Tmax, H),
            out_shape=(jax.ShapeDtypeStruct((Tmax * B_pad, H), jnp.float32),
                       jax.ShapeDtypeStruct((Tmax * B_pad, H), jnp.float32)),
            in_specs=[_VMEM] * 8,
            out_specs=(_VMEM, _VMEM),
        )(xf, xb,
          fwd_p['w_ih'], fwd_p['w_hh'], fwd_p['b'],
          bwd_p['w_ih'], bwd_p['w_hh'], bwd_p['b'])
        of = of.reshape(Tmax, B_pad, H)
        ob = ob.reshape(Tmax, B_pad, H)
        new_h = []
        for s, L in enumerate(lens):
            fwd = of[:L, s, :]
            bwd = ob[:L, s, :][::-1]      # un-reverse the backward direction
            new_h.append(jnp.concatenate([fwd, bwd], axis=1))
        h_list = new_h
    return jnp.concatenate(h_list, axis=0)                    # [T_total, 2H]


def _span_attn_kernel(attn_ref, emb_ref, o_ref):
    # softmax over span positions (dim=1) + attention-weighted embedding sum.
    # attn stays in the sublane axis ([S, W, 1]) so only a lane broadcast is
    # needed against the [S, W, E] embeddings (no lane<->sublane relayout).
    a = attn_ref[...]                                    # [S, W, 1], pad -1e10
    m = jnp.max(a, axis=1, keepdims=True)
    e = jnp.exp(a - m)
    w = e / jnp.sum(e, axis=1, keepdims=True)
    o_ref[...] = jnp.sum(emb_ref[...] * w, axis=1)


def span_attention(padded_attns, padded_embeds):
    S, W = padded_attns.shape
    E = padded_embeds.shape[2]
    S_pad = _round_up(S, 8)
    W_pad = _round_up(W, 8)
    E_pad = _round_up(E, 128)
    a_p = jnp.full((S_pad, W_pad, 1), -1e10, jnp.float32
                   ).at[:S, :W, :].set(padded_attns[:, :, None])
    e_p = jnp.zeros((S_pad, W_pad, E_pad), jnp.float32
                    ).at[:S, :W, :E].set(padded_embeds)
    out = pl.pallas_call(
        _span_attn_kernel,
        out_shape=jax.ShapeDtypeStruct((S_pad, E_pad), jnp.float32),
        in_specs=[_VMEM, _VMEM],
        out_specs=_VMEM,
    )(a_p, e_p)
    return out[:S, :E]


def _group_softmax_kernel(x_ref, len_ref, o_ref):
    # per-mention softmax over (antecedent scores + epsilon), pad with 69
    x = x_ref[...]
    lens = len_ref[...]                                   # [R, 1] int32
    R, W = x.shape
    col = lax.broadcasted_iota(jnp.int32, (R, W), 1)
    mask = col < lens
    xm = jnp.where(mask, x, jnp.float32(-1e30))
    m = jnp.max(xm, axis=1, keepdims=True)
    e = jnp.where(mask, jnp.exp(xm - m), 0.0)
    p = e / jnp.sum(e, axis=1, keepdims=True)
    o_ref[...] = jnp.where(mask, p, jnp.float32(69.0))


def group_softmax(score_mat, len_vec):
    R, W = score_mat.shape
    W_pad = _round_up(W, 128)
    tr = min(128, _round_up(R, 8))
    R_pad = _round_up(R, tr)
    x_p = jnp.zeros((R_pad, W_pad), jnp.float32).at[:R, :W].set(score_mat)
    len_p = jnp.ones((R_pad, 1), jnp.int32).at[:R, :].set(len_vec)
    out = pl.pallas_call(
        _group_softmax_kernel,
        out_shape=jax.ShapeDtypeStruct((R_pad, W_pad), jnp.float32),
        grid=(R_pad // tr,),
        in_specs=[pl.BlockSpec((tr, W_pad), lambda i: (i, 0)),
                  pl.BlockSpec((tr, 1), lambda i: (i, 0))],
        out_specs=pl.BlockSpec((tr, W_pad), lambda i: (i, 0)),
        compiler_params=pltpu.CompilerParams(
            dimension_semantics=("parallel",)),
    )(x_p, len_p)
    return out[:R, :W]


# ----------------------------- document / spans ------------------------------
class Span:
    def __init__(self, start, end, sid, genre, speaker):
        self.start, self.end, self.id = start, end, sid
        self.genre, self.speaker = genre, speaker
        self.si = None
        self.yi = []
        self.yi_idx = []

    def __len__(self):
        return self.end - self.start + 1


class Doc:
    def __init__(self, sentences, genre, speakers):
        self.sentences = sentences      # list[list[str]]
        self.genre = genre
        self.speakers = speakers        # per-sentence speaker

    def __len__(self):
        return sum(len(s) for s in self.sentences)

    def spans(self, max_width=MAX_SPAN_WIDTH):
        out, offset, sid = [], 0, 0
        for s_idx, sent in enumerate(self.sentences):
            L = len(sent)
            for i in range(L):
                for w in range(1, max_width + 1):
                    j = i + w - 1
                    if j < L:
                        out.append(Span(offset + i, offset + j, sid,
                                        self.genre, self.speakers[s_idx]))
                        sid += 1
            offset += L
        return out


def bin_of(num):
    return sum(1 for b in BINS if num >= b)


def remove_overlapping(sorted_spans):
    nonoverlapping, seen = [], set()
    for s in sorted_spans:
        indexes = range(s.start, s.end + 1)
        taken = [i in seen for i in indexes]
        if len(set(taken)) == 1 or (taken[0] == taken[-1] == False):  # noqa: E712
            nonoverlapping.append(s)
            seen.update(indexes)
    return nonoverlapping


def prune(spans, T, LAMBDA=0.4):
    STOP = int(LAMBDA * T)
    sorted_spans = sorted(spans, key=lambda s: s.si, reverse=True)
    nonoverlapping = remove_overlapping(sorted_spans)
    pruned = nonoverlapping[:STOP]
    return sorted(pruned, key=lambda s: (s.start, s.end))


# ------------------------------ parameter init -------------------------------
def init_params(key):
    keys = iter(jax.random.split(key, 64))

    def nrm(shape, scale=0.1):
        return scale * jax.random.normal(next(keys), shape, dtype=jnp.float32)

    params = {}
    emb = nrm((VOCAB_SIZE, EMBEDS_DIM), 1.0)
    params['tok_emb'] = emb.at[0].set(0.0)           # <PAD> row = 0

    lstm = []
    for layer in range(2):
        d_in = EMBEDS_DIM if layer == 0 else LSTM_OUT
        dirs = []
        for _ in range(2):                            # fwd / bwd
            # TODO(synk): single bias b (== b_ih + b_hh folded); not a drop-in
            # mapping of nn.LSTM's two bias vectors.
            dirs.append(dict(
                w_ih=nrm((d_in, 4 * HIDDEN_DIM)).astype(jnp.bfloat16),
                w_hh=nrm((HIDDEN_DIM, 4 * HIDDEN_DIM)).astype(jnp.bfloat16),
                b=nrm((1, 4 * HIDDEN_DIM))))
        lstm.append(dirs)
    params['lstm'] = lstm

    def mlp_params(in_dim):
        # zero-padded to MXU-friendly shapes; pad rows/cols are exactly zero so
        # the padded network computes the same function as the unpadded one.
        in_pad = _round_up(in_dim, 128)
        w1 = jnp.zeros((in_pad, HID_PAD), jnp.float32).at[:in_dim, :MLP_HIDDEN].set(
            nrm((in_dim, MLP_HIDDEN)))
        b1 = jnp.zeros((1, HID_PAD), jnp.float32).at[:, :MLP_HIDDEN].set(
            nrm((1, MLP_HIDDEN)))
        w2 = jnp.zeros((HID_PAD, HID_PAD), jnp.float32).at[:MLP_HIDDEN, :MLP_HIDDEN].set(
            nrm((MLP_HIDDEN, MLP_HIDDEN)))
        b2 = jnp.zeros((1, HID_PAD), jnp.float32).at[:, :MLP_HIDDEN].set(
            nrm((1, MLP_HIDDEN)))
        w3 = jnp.zeros((HID_PAD, OUT_PAD), jnp.float32).at[:MLP_HIDDEN, :1].set(
            nrm((MLP_HIDDEN, 1)))
        b3 = jnp.zeros((1, OUT_PAD), jnp.float32).at[:, :1].set(nrm((1, 1)))
        return dict(w1=w1.astype(jnp.bfloat16), b1=b1,
                    w2=w2.astype(jnp.bfloat16), b2=b2,
                    w3=w3.astype(jnp.bfloat16), b3=b3,
                    in_dim=in_dim, in_pad=in_pad)

    params['attention_mlp'] = mlp_params(LSTM_OUT)
    params['mention_mlp'] = mlp_params(GI_DIM)
    params['pairwise_mlp'] = mlp_params(GIJ_DIM)

    params['dist_emb_mention'] = nrm((len(BINS) + 1, DISTANCE_DIM), 1.0)
    params['dist_emb_pair'] = nrm((len(BINS) + 1, DISTANCE_DIM), 1.0)
    g = nrm((len(GENRES) + 1, GENRE_DIM), 1.0)
    params['genre_emb'] = g.at[0].set(0.0)            # padding_idx = 0
    s = nrm((3, SPEAKER_DIM), 1.0)
    params['speaker_emb'] = s.at[0].set(0.0)          # padding_idx = 0
    return params


# ------------------------------- forward pass --------------------------------
def coref_forward(params, doc, stoi, k=250):
    # ---------------- DocumentEncoder ----------------
    # TODO(synk): emb_dropout / lstm_dropout are treated as eval-mode identity.
    sent_embeds = []
    for sent in doc.sentences:
        ids = jnp.array([stoi.get(tok, 1) for tok in sent], dtype=jnp.int32)
        sent_embeds.append(jnp.take(params['tok_emb'], ids, axis=0))   # [T_s, E]
    states = bilstm_encode_all(sent_embeds, params['lstm'])            # [T, 2H]
    embeds = jnp.concatenate(sent_embeds, axis=0)                      # [T, E]

    # ---------------- MentionScore ----------------
    spans = doc.spans()
    attns = mlp3(states, params['attention_mlp'])                      # [T, 1]
    S = len(spans)
    W = max(len(s) for s in spans)

    idx = np.zeros((S, W), dtype=np.int32)
    msk = np.zeros((S, W), dtype=bool)
    for r, s in enumerate(spans):
        L = len(s)
        idx[r, :L] = np.arange(s.start, s.end + 1)
        msk[r, :L] = True
    idx_j = jnp.array(idx)
    msk_j = jnp.array(msk)
    padded_attns = jnp.where(msk_j, attns[:, 0][idx_j], jnp.float32(-1e10))
    padded_embeds = jnp.where(msk_j[:, :, None], embeds[idx_j], 0.0)
    attn_embeds = span_attention(padded_attns, padded_embeds)          # [S, E]

    width_bins = jnp.array([bin_of(len(s)) for s in spans], dtype=jnp.int32)
    widths = jnp.take(params['dist_emb_mention'], width_bins, axis=0)

    starts = jnp.array([s.start for s in spans], dtype=jnp.int32)
    ends = jnp.array([s.end for s in spans], dtype=jnp.int32)
    start_end = jnp.concatenate([states[starts], states[ends]], axis=1)   # [S, 4H]
    g_i = jnp.concatenate([start_end, attn_embeds, widths], axis=1)       # [S, GI_DIM]
    mention_scores = mlp3(g_i, params['mention_mlp'])                     # [S, 1]

    # pruning (data-dependent Python control flow, uses detached scores)
    ms_host = np.asarray(jax.device_get(mention_scores))[:, 0]
    for s in spans:
        s.si = float(ms_host[s.id])
    spans_pruned = prune(spans, len(doc))
    for i, span in enumerate(spans_pruned):
        span.yi = spans_pruned[max(0, i - k):i]

    # ---------------- PairwiseScore ----------------
    mention_ids, antecedent_ids, distances, genres, speakers = [], [], [], [], []
    span_antecedents_len = []
    for sp in spans_pruned:
        span_antecedents_len.append(len(sp.yi))
        for ant in sp.yi:
            mention_ids.append(sp.id)
            antecedent_ids.append(ant.id)
            distances.append(sp.end - ant.start)
            genres.append(sp.genre)
            speakers.append(1 if sp.speaker == ant.speaker else 2)

    mid = jnp.array(mention_ids, dtype=jnp.int32)
    aid = jnp.array(antecedent_ids, dtype=jnp.int32)
    dist_bins = jnp.array([bin_of(d) for d in distances], dtype=jnp.int32)
    genre_idx = jnp.array([G_TO_I.get(g, 0) for g in genres], dtype=jnp.int32)
    spk_idx = jnp.array(speakers, dtype=jnp.int32)
    phi = jnp.concatenate([jnp.take(params['dist_emb_pair'], dist_bins, axis=0),
                           jnp.take(params['genre_emb'], genre_idx, axis=0),
                           jnp.take(params['speaker_emb'], spk_idx, axis=0)], axis=1)

    i_g = g_i[mid]
    j_g = g_i[aid]
    pairs = jnp.concatenate([i_g, j_g, i_g * j_g, phi], axis=1)      # [P, GIJ_DIM]
    sij = mention_scores[mid] + mention_scores[aid]                  # [P, 1]
    # pairwise MLP with the s_i + s_j add fused into the kernel:
    coref_scores = mlp3(pairs, params['pairwise_mlp'], extra_add=sij)  # [P, 1]
    P = int(coref_scores.shape[0])

    # split per mention, append epsilon (0.0), softmax, pad with 69
    antecedent_idx = [l for l in span_antecedents_len if l]
    lengths = [1] + [l + 1 for l in antecedent_idx]
    R, Wmax = len(lengths), max(lengths)
    gather_idx = np.full((R, Wmax), P, dtype=np.int32)               # P -> epsilon 0
    off, row = 0, 1
    for L in antecedent_idx:
        gather_idx[row, :L] = np.arange(off, off + L)
        gather_idx[row, L] = P
        off += L
        row += 1
    flat = jnp.concatenate([coref_scores[:, 0], jnp.zeros((1,), jnp.float32)])
    score_mat = flat[jnp.array(gather_idx)]
    len_vec = jnp.array(lengths, dtype=jnp.int32)[:, None]
    probs = group_softmax(score_mat, len_vec)                        # [R, Wmax]
    probs = jnp.squeeze(probs)   # matches PyTorch's probs.squeeze()

    for span in spans_pruned:
        span.yi_idx = [((y.start, y.end), (span.start, span.end)) for y in span.yi]

    return spans_pruned, probs


# ---------------------------------- main --------------------------------------
if __name__ == "__main__":
    k_params, k_doc = jax.random.split(jax.random.PRNGKey(0))
    params = init_params(k_params)

    # deterministic synthetic document: 2 sentences of 8 and 6 tokens
    vocab = ['<PAD>', '<UNK>'] + [f'w{i}' for i in range(VOCAB_SIZE - 2)]
    stoi = {w: i for i, w in enumerate(vocab)}
    sent_lens = [8, 6]
    tok_ids = np.asarray(jax.device_get(
        jax.random.randint(k_doc, (sum(sent_lens),), 2, VOCAB_SIZE)))
    sentences, off = [], 0
    for L in sent_lens:
        sentences.append([vocab[i] for i in tok_ids[off:off + L]])
        off += L
    doc = Doc(sentences, genre='nw', speakers=['spk_a', 'spk_b'])

    spans_out, probs = coref_forward(params, doc, stoi)
    probs = jax.block_until_ready(probs)
    probs_np = np.asarray(probs)
    assert probs_np.size > 0 and len(spans_out) > 0
    assert bool(np.all(np.isfinite(probs_np)))
    print("KERNEL_OK")
</pallas_src>

<mosaic_0001>
module attributes {stable_mosaic.version = 11 : i64} {
  func.func @kernel(%arg0: memref<64x64xbf16, #tpu.memory_space<vmem>>, %arg1: memref<64x64xbf16, #tpu.memory_space<vmem>>, %arg2: memref<64x128xbf16, #tpu.memory_space<vmem>>, %arg3: memref<32x128xbf16, #tpu.memory_space<vmem>>, %arg4: memref<1x128xf32, #tpu.memory_space<vmem>>, %arg5: memref<64x128xbf16, #tpu.memory_space<vmem>>, %arg6: memref<32x128xbf16, #tpu.memory_space<vmem>>, %arg7: memref<1x128xf32, #tpu.memory_space<vmem>>, %arg8: memref<64x32xf32, #tpu.memory_space<vmem>>, %arg9: memref<64x32xf32, #tpu.memory_space<vmem>>) attributes {dimension_semantics = [], scalar_prefetch = 0 : i64, scratch_operands = 0 : i64, tpu.core_type = #tpu.core_type<tc>} {
    %c0 = arith.constant 0 : index
    %c0_0 = arith.constant 0 : index
    %0 = vector.load %arg0[%c0, %c0_0] : memref<64x64xbf16, #tpu.memory_space<vmem>>, vector<64x64xbf16>
    %c0_1 = arith.constant 0 : index
    %c0_2 = arith.constant 0 : index
    %1 = vector.load %arg2[%c0_1, %c0_2] : memref<64x128xbf16, #tpu.memory_space<vmem>>, vector<64x128xbf16>
    %cst = arith.constant dense<0.000000e+00> : vector<64x128xf32>
    %2 = tpu.matmul %0, %1, %cst {dimension_numbers = #tpu.dot_dimension_numbers<[1], [0], [0], [1], [0, 0, 1, 1], [], []>} : vector<64x64xbf16>, vector<64x128xbf16>, vector<64x128xf32> -> vector<64x128xf32>
    %c0_3 = arith.constant 0 : index
    %c0_4 = arith.constant 0 : index
    %3 = vector.load %arg4[%c0_3, %c0_4] : memref<1x128xf32, #tpu.memory_space<vmem>>, vector<1x128xf32>
    %4 = vector.broadcast %3 : vector<1x128xf32> to vector<64x128xf32>
    %5 = arith.addf %2, %4 : vector<64x128xf32>
    %c0_5 = arith.constant 0 : index
    %c0_6 = arith.constant 0 : index
    %6 = vector.load %arg1[%c0_5, %c0_6] : memref<64x64xbf16, #tpu.memory_space<vmem>>, vector<64x64xbf16>
    %c0_7 = arith.constant 0 : index
    %c0_8 = arith.constant 0 : index
    %7 = vector.load %arg5[%c0_7, %c0_8] : memref<64x128xbf16, #tpu.memory_space<vmem>>, vector<64x128xbf16>
    %cst_9 = arith.constant dense<0.000000e+00> : vector<64x128xf32>
    %8 = tpu.matmul %6, %7, %cst_9 {dimension_numbers = #tpu.dot_dimension_numbers<[1], [0], [0], [1], [0, 0, 1, 1], [], []>} : vector<64x64xbf16>, vector<64x128xbf16>, vector<64x128xf32> -> vector<64x128xf32>
    %c0_10 = arith.constant 0 : index
    %c0_11 = arith.constant 0 : index
    %9 = vector.load %arg7[%c0_10, %c0_11] : memref<1x128xf32, #tpu.memory_space<vmem>>, vector<1x128xf32>
    %10 = vector.broadcast %9 : vector<1x128xf32> to vector<64x128xf32>
    %11 = arith.addf %8, %10 : vector<64x128xf32>
    %c0_12 = arith.constant 0 : index
    %c0_13 = arith.constant 0 : index
    %12 = vector.load %arg3[%c0_12, %c0_13] : memref<32x128xbf16, #tpu.memory_space<vmem>>, vector<32x128xbf16>
    %c0_14 = arith.constant 0 : index
    %c0_15 = arith.constant 0 : index
    %13 = vector.load %arg6[%c0_14, %c0_15] : memref<32x128xbf16, #tpu.memory_space<vmem>>, vector<32x128xbf16>
    %cst_16 = arith.constant 0.000000e+00 : f32
    %14 = vector.broadcast %cst_16 : f32 to vector<8x32xf32>
    %cst_17 = arith.constant 0.000000e+00 : f32
    %15 = vector.broadcast %cst_17 : f32 to vector<8x32xf32>
    %cst_18 = arith.constant 0.000000e+00 : f32
    %16 = vector.broadcast %cst_18 : f32 to vector<8x32xf32>
    %cst_19 = arith.constant 0.000000e+00 : f32
    %17 = vector.broadcast %cst_19 : f32 to vector<8x32xf32>
    %18 = vector.extract_strided_slice %5 {offsets = [0, 0], sizes = [8, 128], strides = [1, 1]} : vector<64x128xf32> to vector<8x128xf32>
    %19 = arith.truncf %14 : vector<8x32xf32> to vector<8x32xbf16>
    %cst_20 = arith.constant dense<0.000000e+00> : vector<8x128xf32>
    %20 = tpu.matmul %19, %12, %cst_20 {dimension_numbers = #tpu.dot_dimension_numbers<[1], [0], [0], [1], [0, 0, 1, 1], [], []>} : vector<8x32xbf16>, vector<32x128xbf16>, vector<8x128xf32> -> vector<8x128xf32>
    %21 = arith.addf %18, %20 : vector<8x128xf32>
    %22 = vector.extract_strided_slice %21 {offsets = [0, 0], sizes = [8, 32], strides = [1, 1]} : vector<8x128xf32> to vector<8x32xf32>
    %23 = arith.negf %22 : vector<8x32xf32>
    %24 = math.exp %23 : vector<8x32xf32>
    %cst_21 = arith.constant 1.000000e+00 : f32
    %25 = vector.broadcast %cst_21 : f32 to vector<8x32xf32>
    %26 = arith.addf %25, %24 : vector<8x32xf32>
    %27 = arith.divf %25, %26 : vector<8x32xf32>
    %28 = vector.extract_strided_slice %21 {offsets = [0, 32], sizes = [8, 32], strides = [1, 1]} : vector<8x128xf32> to vector<8x32xf32>
    %29 = arith.negf %28 : vector<8x32xf32>
    %30 = math.exp %29 : vector<8x32xf32>
    %cst_22 = arith.constant 1.000000e+00 : f32
    %31 = vector.broadcast %cst_22 : f32 to vector<8x32xf32>
    %32 = arith.addf %31, %30 : vector<8x32xf32>
    %33 = arith.divf %31, %32 : vector<8x32xf32>
    %34 = vector.extract_strided_slice %21 {offsets = [0, 64], sizes = [8, 32], strides = [1, 1]} : vector<8x128xf32> to vector<8x32xf32>
    %35 = math.tanh %34 : vector<8x32xf32>
    %36 = vector.extract_strided_slice %21 {offsets = [0, 96], sizes = [8, 32], strides = [1, 1]} : vector<8x128xf32> to vector<8x32xf32>
    %37 = arith.negf %36 : vector<8x32xf32>
    %38 = math.exp %37 : vector<8x32xf32>
    %cst_23 = arith.constant 1.000000e+00 : f32
    %39 = vector.broadcast %cst_23 : f32 to vector<8x32xf32>
    %40 = arith.addf %39, %38 : vector<8x32xf32>
    %41 = arith.divf %39, %40 : vector<8x32xf32>
    %42 = arith.mulf %33, %15 : vector<8x32xf32>
    %43 = arith.mulf %27, %35 : vector<8x32xf32>
    %44 = arith.addf %42, %43 : vector<8x32xf32>
    %45 = math.tanh %44 : vector<8x32xf32>
    %46 = arith.mulf %41, %45 : vector<8x32xf32>
    %47 = vector.extract_strided_slice %11 {offsets = [0, 0], sizes = [8, 128], strides = [1, 1]} : vector<64x128xf32> to vector<8x128xf32>
    %48 = arith.truncf %16 : vector<8x32xf32> to vector<8x32xbf16>
    %cst_24 = arith.constant dense<0.000000e+00> : vector<8x128xf32>
    %49 = tpu.matmul %48, %13, %cst_24 {dimension_numbers = #tpu.dot_dimension_numbers<[1], [0], [0], [1], [0, 0, 1, 1], [], []>} : vector<8x32xbf16>, vector<32x128xbf16>, vector<8x128xf32> -> vector<8x128xf32>
    %50 = arith.addf %47, %49 : vector<8x128xf32>
    %51 = vector.extract_strided_slice %50 {offsets = [0, 0], sizes = [8, 32], strides = [1, 1]} : vector<8x128xf32> to vector<8x32xf32>
    %52 = arith.negf %51 : vector<8x32xf32>
    %53 = math.exp %52 : vector<8x32xf32>
    %cst_25 = arith.constant 1.000000e+00 : f32
    %54 = vector.broadcast %cst_25 : f32 to vector<8x32xf32>
    %55 = arith.addf %54, %53 : vector<8x32xf32>
    %56 = arith.divf %54, %55 : vector<8x32xf32>
    %57 = vector.extract_strided_slice %50 {offsets = [0, 32], sizes = [8, 32], strides = [1, 1]} : vector<8x128xf32> to vector<8x32xf32>
    %58 = arith.negf %57 : vector<8x32xf32>
    %59 = math.exp %58 : vector<8x32xf32>
    %cst_26 = arith.constant 1.000000e+00 : f32
    %60 = vector.broadcast %cst_26 : f32 to vector<8x32xf32>
    %61 = arith.addf %60, %59 : vector<8x32xf32>
    %62 = arith.divf %60, %61 : vector<8x32xf32>
    %63 = vector.extract_strided_slice %50 {offsets = [0, 64], sizes = [8, 32], strides = [1, 1]} : vector<8x128xf32> to vector<8x32xf32>
    %64 = math.tanh %63 : vector<8x32xf32>
    %65 = vector.extract_strided_slice %50 {offsets = [0, 96], sizes = [8, 32], strides = [1, 1]} : vector<8x128xf32> to vector<8x32xf32>
    %66 = arith.negf %65 : vector<8x32xf32>
    %67 = math.exp %66 : vector<8x32xf32>
    %cst_27 = arith.constant 1.000000e+00 : f32
    %68 = vector.broadcast %cst_27 : f32 to vector<8x32xf32>
    %69 = arith.addf %68, %67 : vector<8x32xf32>
    %70 = arith.divf %68, %69 : vector<8x32xf32>
    %71 = arith.mulf %62, %17 : vector<8x32xf32>
    %72 = arith.mulf %56, %64 : vector<8x32xf32>
    %73 = arith.addf %71, %72 : vector<8x32xf32>
    %74 = math.tanh %73 : vector<8x32xf32>
    %75 = arith.mulf %70, %74 : vector<8x32xf32>
    %76 = vector.extract_strided_slice %5 {offsets = [8, 0], sizes = [8, 128], strides = [1, 1]} : vector<64x128xf32> to vector<8x128xf32>
    %77 = arith.truncf %46 : vector<8x32xf32> to vector<8x32xbf16>
    %cst_28 = arith.constant dense<0.000000e+00> : vector<8x128xf32>
    %78 = tpu.matmul %77, %12, %cst_28 {dimension_numbers = #tpu.dot_dimension_numbers<[1], [0], [0], [1], [0, 0, 1, 1], [], []>} : vector<8x32xbf16>, vector<32x128xbf16>, vector<8x128xf32> -> vector<8x128xf32>
    %79 = arith.addf %76, %78 : vector<8x128xf32>
    %80 = vector.extract_strided_slice %79 {offsets = [0, 0], sizes = [8, 32], strides = [1, 1]} : vector<8x128xf32> to vector<8x32xf32>
    %81 = arith.negf %80 : vector<8x32xf32>
    %82 = math.exp %81 : vector<8x32xf32>
    %cst_29 = arith.constant 1.000000e+00 : f32
    %83 = vector.broadcast %cst_29 : f32 to vector<8x32xf32>
    %84 = arith.addf %83, %82 : vector<8x32xf32>
    %85 = arith.divf %83, %84 : vector<8x32xf32>
    %86 = vector.extract_strided_slice %79 {offsets = [0, 32], sizes = [8, 32], strides = [1, 1]} : vector<8x128xf32> to vector<8x32xf32>
    %87 = arith.negf %86 : vector<8x32xf32>
    %88 = math.exp %87 : vector<8x32xf32>
    %cst_30 = arith.constant 1.000000e+00 : f32
    %89 = vector.broadcast %cst_30 : f32 to vector<8x32xf32>
    %90 = arith.addf %89, %88 : vector<8x32xf32>
    %91 = arith.divf %89, %90 : vector<8x32xf32>
    %92 = vector.extract_strided_slice %79 {offsets = [0, 64], sizes = [8, 32], strides = [1, 1]} : vector<8x128xf32> to vector<8x32xf32>
    %93 = math.tanh %92 : vector<8x32xf32>
    %94 = vector.extract_strided_slice %79 {offsets = [0, 96], sizes = [8, 32], strides = [1, 1]} : vector<8x128xf32> to vector<8x32xf32>
    %95 = arith.negf %94 : vector<8x32xf32>
    %96 = math.exp %95 : vector<8x32xf32>
    %cst_31 = arith.constant 1.000000e+00 : f32
    %97 = vector.broadcast %cst_31 : f32 to vector<8x32xf32>
    %98 = arith.addf %97, %96 : vector<8x32xf32>
    %99 = arith.divf %97, %98 : vector<8x32xf32>
    %100 = arith.mulf %91, %44 : vector<8x32xf32>
    %101 = arith.mulf %85, %93 : vector<8x32xf32>
    %102 = arith.addf %100, %101 : vector<8x32xf32>
    %103 = math.tanh %102 : vector<8x32xf32>
    %104 = arith.mulf %99, %103 : vector<8x32xf32>
    %105 = vector.extract_strided_slice %11 {offsets = [8, 0], sizes = [8, 128], strides = [1, 1]} : vector<64x128xf32> to vector<8x128xf32>
    %106 = arith.truncf %75 : vector<8x32xf32> to vector<8x32xbf16>
    %cst_32 = arith.constant dense<0.000000e+00> : vector<8x128xf32>
    %107 = tpu.matmul %106, %13, %cst_32 {dimension_numbers = #tpu.dot_dimension_numbers<[1], [0], [0], [1], [0, 0, 1, 1], [], []>} : vector<8x32xbf16>, vector<32x128xbf16>, vector<8x128xf32> -> vector<8x128xf32>
    %108 = arith.addf %105, %107 : vector<8x128xf32>
    %109 = vector.extract_strided_slice %108 {offsets = [0, 0], sizes = [8, 32], strides = [1, 1]} : vector<8x128xf32> to vector<8x32xf32>
    %110 = arith.negf %109 : vector<8x32xf32>
    %111 = math.exp %110 : vector<8x32xf32>
    %cst_33 = arith.constant 1.000000e+00 : f32
    %112 = vector.broadcast %cst_33 : f32 to vector<8x32xf32>
    %113 = arith.addf %112, %111 : vector<8x32xf32>
    %114 = arith.divf %112, %113 : vector<8x32xf32>
    %115 = vector.extract_strided_slice %108 {offsets = [0, 32], sizes = [8, 32], strides = [1, 1]} : vector<8x128xf32> to vector<8x32xf32>
    %116 = arith.negf %115 : vector<8x32xf32>
    %117 = math.exp %116 : vector<8x32xf32>
    %cst_34 = arith.constant 1.000000e+00 : f32
    %118 = vector.broadcast %cst_34 : f32 to vector<8x32xf32>
    %119 = arith.addf %118, %117 : vector<8x32xf32>
    %120 = arith.divf %118, %119 : vector<8x32xf32>
    %121 = vector.extract_strided_slice %108 {offsets = [0, 64], sizes = [8, 32], strides = [1, 1]} : vector<8x128xf32> to vector<8x32xf32>
    %122 = math.tanh %121 : vector<8x32xf32>
    %123 = vector.extract_strided_slice %108 {offsets = [0, 96], sizes = [8, 32], strides = [1, 1]} : vector<8x128xf32> to vector<8x32xf32>
    %124 = arith.negf %123 : vector<8x32xf32>
    %125 = math.exp %124 : vector<8x32xf32>
    %cst_35 = arith.constant 1.000000e+00 : f32
    %126 = vector.broadcast %cst_35 : f32 to vector<8x32xf32>
    %127 = arith.addf %126, %125 : vector<8x32xf32>
    %128 = arith.divf %126, %127 : vector<8x32xf32>
    %129 = arith.mulf %120, %73 : vector<8x32xf32>
    %130 = arith.mulf %114, %122 : vector<8x32xf32>
    %131 = arith.addf %129, %130 : vector<8x32xf32>
    %132 = math.tanh %131 : vector<8x32xf32>
    %133 = arith.mulf %128, %132 : vector<8x32xf32>
    %134 = vector.extract_strided_slice %5 {offsets = [16, 0], sizes = [8, 128], strides = [1, 1]} : vector<64x128xf32> to vector<8x128xf32>
    %135 = arith.truncf %104 : vector<8x32xf32> to vector<8x32xbf16>
    %cst_36 = arith.constant dense<0.000000e+00> : vector<8x128xf32>
    %136 = tpu.matmul %135, %12, %cst_36 {dimension_numbers = #tpu.dot_dimension_numbers<[1], [0], [0], [1], [0, 0, 1, 1], [], []>} : vector<8x32xbf16>, vector<32x128xbf16>, vector<8x128xf32> -> vector<8x128xf32>
    %137 = arith.addf %134, %136 : vector<8x128xf32>
    %138 = vector.extract_strided_slice %137 {offsets = [0, 0], sizes = [8, 32], strides = [1, 1]} : vector<8x128xf32> to vector<8x32xf32>
    %139 = arith.negf %138 : vector<8x32xf32>
    %140 = math.exp %139 : vector<8x32xf32>
    %cst_37 = arith.constant 1.000000e+00 : f32
    %141 = vector.broadcast %cst_37 : f32 to vector<8x32xf32>
    %142 = arith.addf %141, %140 : vector<8x32xf32>
    %143 = arith.divf %141, %142 : vector<8x32xf32>
    %144 = vector.extract_strided_slice %137 {offsets = [0, 32], sizes = [8, 32], strides = [1, 1]} : vector<8x128xf32> to vector<8x32xf32>
    %145 = arith.negf %144 : vector<8x32xf32>
    %146 = math.exp %145 : vector<8x32xf32>
    %cst_38 = arith.constant 1.000000e+00 : f32
    %147 = vector.broadcast %cst_38 : f32 to vector<8x32xf32>
    %148 = arith.addf %147, %146 : vector<8x32xf32>
    %149 = arith.divf %147, %148 : vector<8x32xf32>
    %150 = vector.extract_strided_slice %137 {offsets = [0, 64], sizes = [8, 32], strides = [1, 1]} : vector<8x128xf32> to vector<8x32xf32>
    %151 = math.tanh %150 : vector<8x32xf32>
    %152 = vector.extract_strided_slice %137 {offsets = [0, 96], sizes = [8, 32], strides = [1, 1]} : vector<8x128xf32> to vector<8x32xf32>
    %153 = arith.negf %152 : vector<8x32xf32>
    %154 = math.exp %153 : vector<8x32xf32>
    %cst_39 = arith.constant 1.000000e+00 : f32
    %155 = vector.broadcast %cst_39 : f32 to vector<8x32xf32>
    %156 = arith.addf %155, %154 : vector<8x32xf32>
    %157 = arith.divf %155, %156 : vector<8x32xf32>
    %158 = arith.mulf %149, %102 : vector<8x32xf32>
    %159 = arith.mulf %143, %151 : vector<8x32xf32>
    %160 = arith.addf %158, %159 : vector<8x32xf32>
    %161 = math.tanh %160 : vector<8x32xf32>
    %162 = arith.mulf %157, %161 : vector<8x32xf32>
    %163 = vector.extract_strided_slice %11 {offsets = [16, 0], sizes = [8, 128], strides = [1, 1]} : vector<64x128xf32> to vector<8x128xf32>
    %164 = arith.truncf %133 : vector<8x32xf32> to vector<8x32xbf16>
    %cst_40 = arith.constant dense<0.000000e+00> : vector<8x128xf32>
    %165 = tpu.matmul %164, %13, %cst_40 {dimension_numbers = #tpu.dot_dimension_numbers<[1], [0], [0], [1], [0, 0, 1, 1], [], []>} : vector<8x32xbf16>, vector<32x128xbf16>, vector<8x128xf32> -> vector<8x128xf32>
    %166 = arith.addf %163, %165 : vector<8x128xf32>
    %167 = vector.extract_strided_slice %166 {offsets = [0, 0], sizes = [8, 32], strides = [1, 1]} : vector<8x128xf32> to vector<8x32xf32>
    %168 = arith.negf %167 : vector<8x32xf32>
    %169 = math.exp %168 : vector<8x32xf32>
    %cst_41 = arith.constant 1.000000e+00 : f32
    %170 = vector.broadcast %cst_41 : f32 to vector<8x32xf32>
    %171 = arith.addf %170, %169 : vector<8x32xf32>
    %172 = arith.divf %170, %171 : vector<8x32xf32>
    %173 = vector.extract_strided_slice %166 {offsets = [0, 32], sizes = [8, 32], strides = [1, 1]} : vector<8x128xf32> to vector<8x32xf32>
    %174 = arith.negf %173 : vector<8x32xf32>
    %175 = math.exp %174 : vector<8x32xf32>
    %cst_42 = arith.constant 1.000000e+00 : f32
    %176 = vector.broadcast %cst_42 : f32 to vector<8x32xf32>
    %177 = arith.addf %176, %175 : vector<8x32xf32>
    %178 = arith.divf %176, %177 : vector<8x32xf32>
    %179 = vector.extract_strided_slice %166 {offsets = [0, 64], sizes = [8, 32], strides = [1, 1]} : vector<8x128xf32> to vector<8x32xf32>
    %180 = math.tanh %179 : vector<8x32xf32>
    %181 = vector.extract_strided_slice %166 {offsets = [0, 96], sizes = [8, 32], strides = [1, 1]} : vector<8x128xf32> to vector<8x32xf32>
    %182 = arith.negf %181 : vector<8x32xf32>
    %183 = math.exp %182 : vector<8x32xf32>
    %cst_43 = arith.constant 1.000000e+00 : f32
    %184 = vector.broadcast %cst_43 : f32 to vector<8x32xf32>
    %185 = arith.addf %184, %183 : vector<8x32xf32>
    %186 = arith.divf %184, %185 : vector<8x32xf32>
    %187 = arith.mulf %178, %131 : vector<8x32xf32>
    %188 = arith.mulf %172, %180 : vector<8x32xf32>
    %189 = arith.addf %187, %188 : vector<8x32xf32>
    %190 = math.tanh %189 : vector<8x32xf32>
    %191 = arith.mulf %186, %190 : vector<8x32xf32>
    %192 = vector.extract_strided_slice %5 {offsets = [24, 0], sizes = [8, 128], strides = [1, 1]} : vector<64x128xf32> to vector<8x128xf32>
    %193 = arith.truncf %162 : vector<8x32xf32> to vector<8x32xbf16>
    %cst_44 = arith.constant dense<0.000000e+00> : vector<8x128xf32>
    %194 = tpu.matmul %193, %12, %cst_44 {dimension_numbers = #tpu.dot_dimension_numbers<[1], [0], [0], [1], [0, 0, 1, 1], [], []>} : vector<8x32xbf16>, vector<32x128xbf16>, vector<8x128xf32> -> vector<8x128xf32>
    %195 = arith.addf %192, %194 : vector<8x128xf32>
    %196 = vector.extract_strided_slice %195 {offsets = [0, 0], sizes = [8, 32], strides = [1, 1]} : vector<8x128xf32> to vector<8x32xf32>
    %197 = arith.negf %196 : vector<8x32xf32>
    %198 = math.exp %197 : vector<8x32xf32>
    %cst_45 = arith.constant 1.000000e+00 : f32
    %199 = vector.broadcast %cst_45 : f32 to vector<8x32xf32>
    %200 = arith.addf %199, %198 : vector<8x32xf32>
    %201 = arith.divf %199, %200 : vector<8x32xf32>
    %202 = vector.extract_strided_slice %195 {offsets = [0, 32], sizes = [8, 32], strides = [1, 1]} : vector<8x128xf32> to vector<8x32xf32>
    %203 = arith.negf %202 : vector<8x32xf32>
    %204 = math.exp %203 : vector<8x32xf32>
    %cst_46 = arith.constant 1.000000e+00 : f32
    %205 = vector.broadcast %cst_46 : f32 to vector<8x32xf32>
    %206 = arith.addf %205, %204 : vector<8x32xf32>
    %207 = arith.divf %205, %206 : vector<8x32xf32>
    %208 = vector.extract_strided_slice %195 {offsets = [0, 64], sizes = [8, 32], strides = [1, 1]} : vector<8x128xf32> to vector<8x32xf32>
    %209 = math.tanh %208 : vector<8x32xf32>
    %210 = vector.extract_strided_slice %195 {offsets = [0, 96], sizes = [8, 32], strides = [1, 1]} : vector<8x128xf32> to vector<8x32xf32>
    %211 = arith.negf %210 : vector<8x32xf32>
    %212 = math.exp %211 : vector<8x32xf32>
    %cst_47 = arith.constant 1.000000e+00 : f32
    %213 = vector.broadcast %cst_47 : f32 to vector<8x32xf32>
    %214 = arith.addf %213, %212 : vector<8x32xf32>
    %215 = arith.divf %213, %214 : vector<8x32xf32>
    %216 = arith.mulf %207, %160 : vector<8x32xf32>
    %217 = arith.mulf %201, %209 : vector<8x32xf32>
    %218 = arith.addf %216, %217 : vector<8x32xf32>
    %219 = math.tanh %218 : vector<8x32xf32>
    %220 = arith.mulf %215, %219 : vector<8x32xf32>
    %221 = vector.extract_strided_slice %11 {offsets = [24, 0], sizes = [8, 128], strides = [1, 1]} : vector<64x128xf32> to vector<8x128xf32>
    %222 = arith.truncf %191 : vector<8x32xf32> to vector<8x32xbf16>
    %cst_48 = arith.constant dense<0.000000e+00> : vector<8x128xf32>
    %223 = tpu.matmul %222, %13, %cst_48 {dimension_numbers = #tpu.dot_dimension_numbers<[1], [0], [0], [1], [0, 0, 1, 1], [], []>} : vector<8x32xbf16>, vector<32x128xbf16>, vector<8x128xf32> -> vector<8x128xf32>
    %224 = arith.addf %221, %223 : vector<8x128xf32>
    %225 = vector.extract_strided_slice %224 {offsets = [0, 0], sizes = [8, 32], strides = [1, 1]} : vector<8x128xf32> to vector<8x32xf32>
    %226 = arith.negf %225 : vector<8x32xf32>
    %227 = math.exp %226 : vector<8x32xf32>
    %cst_49 = arith.constant 1.000000e+00 : f32
    %228 = vector.broadcast %cst_49 : f32 to vector<8x32xf32>
    %229 = arith.addf %228, %227 : vector<8x32xf32>
    %230 = arith.divf %228, %229 : vector<8x32xf32>
    %231 = vector.extract_strided_slice %224 {offsets = [0, 32], sizes = [8, 32], strides = [1, 1]} : vector<8x128xf32> to vector<8x32xf32>
    %232 = arith.negf %231 : vector<8x32xf32>
    %233 = math.exp %232 : vector<8x32xf32>
    %cst_50 = arith.constant 1.000000e+00 : f32
    %234 = vector.broadcast %cst_50 : f32 to vector<8x32xf32>
    %235 = arith.addf %234, %233 : vector<8x32xf32>
    %236 = arith.divf %234, %235 : vector<8x32xf32>
    %237 = vector.extract_strided_slice %224 {offsets = [0, 64], sizes = [8, 32], strides = [1, 1]} : vector<8x128xf32> to vector<8x32xf32>
    %238 = math.tanh %237 : vector<8x32xf32>
    %239 = vector.extract_strided_slice %224 {offsets = [0, 96], sizes = [8, 32], strides = [1, 1]} : vector<8x128xf32> to vector<8x32xf32>
    %240 = arith.negf %239 : vector<8x32xf32>
    %241 = math.exp %240 : vector<8x32xf32>
    %cst_51 = arith.constant 1.000000e+00 : f32
    %242 = vector.broadcast %cst_51 : f32 to vector<8x32xf32>
    %243 = arith.addf %242, %241 : vector<8x32xf32>
    %244 = arith.divf %242, %243 : vector<8x32xf32>
    %245 = arith.mulf %236, %189 : vector<8x32xf32>
    %246 = arith.mulf %230, %238 : vector<8x32xf32>
    %247 = arith.addf %245, %246 : vector<8x32xf32>
    %248 = math.tanh %247 : vector<8x32xf32>
    %249 = arith.mulf %244, %248 : vector<8x32xf32>
    %250 = vector.extract_strided_slice %5 {offsets = [32, 0], sizes = [8, 128], strides = [1, 1]} : vector<64x128xf32> to vector<8x128xf32>
    %251 = arith.truncf %220 : vector<8x32xf32> to vector<8x32xbf16>
    %cst_52 = arith.constant dense<0.000000e+00> : vector<8x128xf32>
    %252 = tpu.matmul %251, %12, %cst_52 {dimension_numbers = #tpu.dot_dimension_numbers<[1], [0], [0], [1], [0, 0, 1, 1], [], []>} : vector<8x32xbf16>, vector<32x128xbf16>, vector<8x128xf32> -> vector<8x128xf32>
    %253 = arith.addf %250, %252 : vector<8x128xf32>
    %254 = vector.extract_strided_slice %253 {offsets = [0, 0], sizes = [8, 32], strides = [1, 1]} : vector<8x128xf32> to vector<8x32xf32>
    %255 = arith.negf %254 : vector<8x32xf32>
    %256 = math.exp %255 : vector<8x32xf32>
    %cst_53 = arith.constant 1.000000e+00 : f32
    %257 = vector.broadcast %cst_53 : f32 to vector<8x32xf32>
    %258 = arith.addf %257, %256 : vector<8x32xf32>
    %259 = arith.divf %257, %258 : vector<8x32xf32>
    %260 = vector.extract_strided_slice %253 {offsets = [0, 32], sizes = [8, 32], strides = [1, 1]} : vector<8x128xf32> to vector<8x32xf32>
    %261 = arith.negf %260 : vector<8x32xf32>
    %262 = math.exp %261 : vector<8x32xf32>
    %cst_54 = arith.constant 1.000000e+00 : f32
    %263 = vector.broadcast %cst_54 : f32 to vector<8x32xf32>
    %264 = arith.addf %263, %262 : vector<8x32xf32>
    %265 = arith.divf %263, %264 : vector<8x32xf32>
    %266 = vector.extract_strided_slice %253 {offsets = [0, 64], sizes = [8, 32], strides = [1, 1]} : vector<8x128xf32> to vector<8x32xf32>
    %267 = math.tanh %266 : vector<8x32xf32>
    %268 = vector.extract_strided_slice %253 {offsets = [0, 96], sizes = [8, 32], strides = [1, 1]} : vector<8x128xf32> to vector<8x32xf32>
    %269 = arith.negf %268 : vector<8x32xf32>
    %270 = math.exp %269 : vector<8x32xf32>
    %cst_55 = arith.constant 1.000000e+00 : f32
    %271 = vector.broadcast %cst_55 : f32 to vector<8x32xf32>
    %272 = arith.addf %271, %270 : vector<8x32xf32>
    %273 = arith.divf %271, %272 : vector<8x32xf32>
    %274 = arith.mulf %265, %218 : vector<8x32xf32>
    %275 = arith.mulf %259, %267 : vector<8x32xf32>
    %276 = arith.addf %274, %275 : vector<8x32xf32>
    %277 = math.tanh %276 : vector<8x32xf32>
    %278 = arith.mulf %273, %277 : vector<8x32xf32>
    %279 = vector.extract_strided_slice %11 {offsets = [32, 0], sizes = [8, 128], strides = [1, 1]} : vector<64x128xf32> to vector<8x128xf32>
    %280 = arith.truncf %249 : vector<8x32xf32> to vector<8x32xbf16>
    %cst_56 = arith.constant dense<0.000000e+00> : vector<8x128xf32>
    %281 = tpu.matmul %280, %13, %cst_56 {dimension_numbers = #tpu.dot_dimension_numbers<[1], [0], [0], [1], [0, 0, 1, 1], [], []>} : vector<8x32xbf16>, vector<32x128xbf16>, vector<8x128xf32> -> vector<8x128xf32>
    %282 = arith.addf %279, %281 : vector<8x128xf32>
    %283 = vector.extract_strided_slice %282 {offsets = [0, 0], sizes = [8, 32], strides = [1, 1]} : vector<8x128xf32> to vector<8x32xf32>
    %284 = arith.negf %283 : vector<8x32xf32>
    %285 = math.exp %284 : vector<8x32xf32>
    %cst_57 = arith.constant 1.000000e+00 : f32
    %286 = vector.broadcast %cst_57 : f32 to vector<8x32xf32>
    %287 = arith.addf %286, %285 : vector<8x32xf32>
    %288 = arith.divf %286, %287 : vector<8x32xf32>
    %289 = vector.extract_strided_slice %282 {offsets = [0, 32], sizes = [8, 32], strides = [1, 1]} : vector<8x128xf32> to vector<8x32xf32>
    %290 = arith.negf %289 : vector<8x32xf32>
    %291 = math.exp %290 : vector<8x32xf32>
    %cst_58 = arith.constant 1.000000e+00 : f32
    %292 = vector.broadcast %cst_58 : f32 to vector<8x32xf32>
    %293 = arith.addf %292, %291 : vector<8x32xf32>
    %294 = arith.divf %292, %293 : vector<8x32xf32>
    %295 = vector.extract_strided_slice %282 {offsets = [0, 64], sizes = [8, 32], strides = [1, 1]} : vector<8x128xf32> to vector<8x32xf32>
    %296 = math.tanh %295 : vector<8x32xf32>
    %297 = vector.extract_strided_slice %282 {offsets = [0, 96], sizes = [8, 32], strides = [1, 1]} : vector<8x128xf32> to vector<8x32xf32>
    %298 = arith.negf %297 : vector<8x32xf32>
    %299 = math.exp %298 : vector<8x32xf32>
    %cst_59 = arith.constant 1.000000e+00 : f32
    %300 = vector.broadcast %cst_59 : f32 to vector<8x32xf32>
    %301 = arith.addf %300, %299 : vector<8x32xf32>
    %302 = arith.divf %300, %301 : vector<8x32xf32>
    %303 = arith.mulf %294, %247 : vector<8x32xf32>
    %304 = arith.mulf %288, %296 : vector<8x32xf32>
    %305 = arith.addf %303, %304 : vector<8x32xf32>
    %306 = math.tanh %305 : vector<8x32xf32>
    %307 = arith.mulf %302, %306 : vector<8x32xf32>
    %308 = vector.extract_strided_slice %5 {offsets = [40, 0], sizes = [8, 128], strides = [1, 1]} : vector<64x128xf32> to vector<8x128xf32>
    %309 = arith.truncf %278 : vector<8x32xf32> to vector<8x32xbf16>
    %cst_60 = arith.constant dense<0.000000e+00> : vector<8x128xf32>
    %310 = tpu.matmul %309, %12, %cst_60 {dimension_numbers = #tpu.dot_dimension_numbers<[1], [0], [0], [1], [0, 0, 1, 1], [], []>} : vector<8x32xbf16>, vector<32x128xbf16>, vector<8x128xf32> -> vector<8x128xf32>
    %311 = arith.addf %308, %310 : vector<8x128xf32>
    %312 = vector.extract_strided_slice %311 {offsets = [0, 0], sizes = [8, 32], strides = [1, 1]} : vector<8x128xf32> to vector<8x32xf32>
    %313 = arith.negf %312 : vector<8x32xf32>
    %314 = math.exp %313 : vector<8x32xf32>
    %cst_61 = arith.constant 1.000000e+00 : f32
    %315 = vector.broadcast %cst_61 : f32 to vector<8x32xf32>
    %316 = arith.addf %315, %314 : vector<8x32xf32>
    %317 = arith.divf %315, %316 : vector<8x32xf32>
    %318 = vector.extract_strided_slice %311 {offsets = [0, 32], sizes = [8, 32], strides = [1, 1]} : vector<8x128xf32> to vector<8x32xf32>
    %319 = arith.negf %318 : vector<8x32xf32>
    %320 = math.exp %319 : vector<8x32xf32>
    %cst_62 = arith.constant 1.000000e+00 : f32
    %321 = vector.broadcast %cst_62 : f32 to vector<8x32xf32>
    %322 = arith.addf %321, %320 : vector<8x32xf32>
    %323 = arith.divf %321, %322 : vector<8x32xf32>
    %324 = vector.extract_strided_slice %311 {offsets = [0, 64], sizes = [8, 32], strides = [1, 1]} : vector<8x128xf32> to vector<8x32xf32>
    %325 = math.tanh %324 : vector<8x32xf32>
    %326 = vector.extract_strided_slice %311 {offsets = [0, 96], sizes = [8, 32], strides = [1, 1]} : vector<8x128xf32> to vector<8x32xf32>
    %327 = arith.negf %326 : vector<8x32xf32>
    %328 = math.exp %327 : vector<8x32xf32>
    %cst_63 = arith.constant 1.000000e+00 : f32
    %329 = vector.broadcast %cst_63 : f32 to vector<8x32xf32>
    %330 = arith.addf %329, %328 : vector<8x32xf32>
    %331 = arith.divf %329, %330 : vector<8x32xf32>
    %332 = arith.mulf %323, %276 : vector<8x32xf32>
    %333 = arith.mulf %317, %325 : vector<8x32xf32>
    %334 = arith.addf %332, %333 : vector<8x32xf32>
    %335 = math.tanh %334 : vector<8x32xf32>
    %336 = arith.mulf %331, %335 : vector<8x32xf32>
    %337 = vector.extract_strided_slice %11 {offsets = [40, 0], sizes = [8, 128], strides = [1, 1]} : vector<64x128xf32> to vector<8x128xf32>
    %338 = arith.truncf %307 : vector<8x32xf32> to vector<8x32xbf16>
    %cst_64 = arith.constant dense<0.000000e+00> : vector<8x128xf32>
    %339 = tpu.matmul %338, %13, %cst_64 {dimension_numbers = #tpu.dot_dimension_numbers<[1], [0], [0], [1], [0, 0, 1, 1], [], []>} : vector<8x32xbf16>, vector<32x128xbf16>, vector<8x128xf32> -> vector<8x128xf32>
    %340 = arith.addf %337, %339 : vector<8x128xf32>
    %341 = vector.extract_strided_slice %340 {offsets = [0, 0], sizes = [8, 32], strides = [1, 1]} : vector<8x128xf32> to vector<8x32xf32>
    %342 = arith.negf %341 : vector<8x32xf32>
    %343 = math.exp %342 : vector<8x32xf32>
    %cst_65 = arith.constant 1.000000e+00 : f32
    %344 = vector.broadcast %cst_65 : f32 to vector<8x32xf32>
    %345 = arith.addf %344, %343 : vector<8x32xf32>
    %346 = arith.divf %344, %345 : vector<8x32xf32>
    %347 = vector.extract_strided_slice %340 {offsets = [0, 32], sizes = [8, 32], strides = [1, 1]} : vector<8x128xf32> to vector<8x32xf32>
    %348 = arith.negf %347 : vector<8x32xf32>
    %349 = math.exp %348 : vector<8x32xf32>
    %cst_66 = arith.constant 1.000000e+00 : f32
    %350 = vector.broadcast %cst_66 : f32 to vector<8x32xf32>
    %351 = arith.addf %350, %349 : vector<8x32xf32>
    %352 = arith.divf %350, %351 : vector<8x32xf32>
    %353 = vector.extract_strided_slice %340 {offsets = [0, 64], sizes = [8, 32], strides = [1, 1]} : vector<8x128xf32> to vector<8x32xf32>
    %354 = math.tanh %353 : vector<8x32xf32>
    %355 = vector.extract_strided_slice %340 {offsets = [0, 96], sizes = [8, 32], strides = [1, 1]} : vector<8x128xf32> to vector<8x32xf32>
    %356 = arith.negf %355 : vector<8x32xf32>
    %357 = math.exp %356 : vector<8x32xf32>
    %cst_67 = arith.constant 1.000000e+00 : f32
    %358 = vector.broadcast %cst_67 : f32 to vector<8x32xf32>
    %359 = arith.addf %358, %357 : vector<8x32xf32>
    %360 = arith.divf %358, %359 : vector<8x32xf32>
    %361 = arith.mulf %352, %305 : vector<8x32xf32>
    %362 = arith.mulf %346, %354 : vector<8x32xf32>
    %363 = arith.addf %361, %362 : vector<8x32xf32>
    %364 = math.tanh %363 : vector<8x32xf32>
    %365 = arith.mulf %360, %364 : vector<8x32xf32>
    %366 = vector.extract_strided_slice %5 {offsets = [48, 0], sizes = [8, 128], strides = [1, 1]} : vector<64x128xf32> to vector<8x128xf32>
    %367 = arith.truncf %336 : vector<8x32xf32> to vector<8x32xbf16>
    %cst_68 = arith.constant dense<0.000000e+00> : vector<8x128xf32>
    %368 = tpu.matmul %367, %12, %cst_68 {dimension_numbers = #tpu.dot_dimension_numbers<[1], [0], [0], [1], [0, 0, 1, 1], [], []>} : vector<8x32xbf16>, vector<32x128xbf16>, vector<8x128xf32> -> vector<8x128xf32>
    %369 = arith.addf %366, %368 : vector<8x128xf32>
    %370 = vector.extract_strided_slice %369 {offsets = [0, 0], sizes = [8, 32], strides = [1, 1]} : vector<8x128xf32> to vector<8x32xf32>
    %371 = arith.negf %370 : vector<8x32xf32>
    %372 = math.exp %371 : vector<8x32xf32>
    %cst_69 = arith.constant 1.000000e+00 : f32
    %373 = vector.broadcast %cst_69 : f32 to vector<8x32xf32>
    %374 = arith.addf %373, %372 : vector<8x32xf32>
    %375 = arith.divf %373, %374 : vector<8x32xf32>
    %376 = vector.extract_strided_slice %369 {offsets = [0, 32], sizes = [8, 32], strides = [1, 1]} : vector<8x128xf32> to vector<8x32xf32>
    %377 = arith.negf %376 : vector<8x32xf32>
    %378 = math.exp %377 : vector<8x32xf32>
    %cst_70 = arith.constant 1.000000e+00 : f32
    %379 = vector.broadcast %cst_70 : f32 to vector<8x32xf32>
    %380 = arith.addf %379, %378 : vector<8x32xf32>
    %381 = arith.divf %379, %380 : vector<8x32xf32>
    %382 = vector.extract_strided_slice %369 {offsets = [0, 64], sizes = [8, 32], strides = [1, 1]} : vector<8x128xf32> to vector<8x32xf32>
    %383 = math.tanh %382 : vector<8x32xf32>
    %384 = vector.extract_strided_slice %369 {offsets = [0, 96], sizes = [8, 32], strides = [1, 1]} : vector<8x128xf32> to vector<8x32xf32>
    %385 = arith.negf %384 : vector<8x32xf32>
    %386 = math.exp %385 : vector<8x32xf32>
    %cst_71 = arith.constant 1.000000e+00 : f32
    %387 = vector.broadcast %cst_71 : f32 to vector<8x32xf32>
    %388 = arith.addf %387, %386 : vector<8x32xf32>
    %389 = arith.divf %387, %388 : vector<8x32xf32>
    %390 = arith.mulf %381, %334 : vector<8x32xf32>
    %391 = arith.mulf %375, %383 : vector<8x32xf32>
    %392 = arith.addf %390, %391 : vector<8x32xf32>
    %393 = math.tanh %392 : vector<8x32xf32>
    %394 = arith.mulf %389, %393 : vector<8x32xf32>
    %395 = vector.extract_strided_slice %11 {offsets = [48, 0], sizes = [8, 128], strides = [1, 1]} : vector<64x128xf32> to vector<8x128xf32>
    %396 = arith.truncf %365 : vector<8x32xf32> to vector<8x32xbf16>
    %cst_72 = arith.constant dense<0.000000e+00> : vector<8x128xf32>
    %397 = tpu.matmul %396, %13, %cst_72 {dimension_numbers = #tpu.dot_dimension_numbers<[1], [0], [0], [1], [0, 0, 1, 1], [], []>} : vector<8x32xbf16>, vector<32x128xbf16>, vector<8x128xf32> -> vector<8x128xf32>
    %398 = arith.addf %395, %397 : vector<8x128xf32>
    %399 = vector.extract_strided_slice %398 {offsets = [0, 0], sizes = [8, 32], strides = [1, 1]} : vector<8x128xf32> to vector<8x32xf32>
    %400 = arith.negf %399 : vector<8x32xf32>
    %401 = math.exp %400 : vector<8x32xf32>
    %cst_73 = arith.constant 1.000000e+00 : f32
    %402 = vector.broadcast %cst_73 : f32 to vector<8x32xf32>
    %403 = arith.addf %402, %401 : vector<8x32xf32>
    %404 = arith.divf %402, %403 : vector<8x32xf32>
    %405 = vector.extract_strided_slice %398 {offsets = [0, 32], sizes = [8, 32], strides = [1, 1]} : vector<8x128xf32> to vector<8x32xf32>
    %406 = arith.negf %405 : vector<8x32xf32>
    %407 = math.exp %406 : vector<8x32xf32>
    %cst_74 = arith.constant 1.000000e+00 : f32
    %408 = vector.broadcast %cst_74 : f32 to vector<8x32xf32>
    %409 = arith.addf %408, %407 : vector<8x32xf32>
    %410 = arith.divf %408, %409 : vector<8x32xf32>
    %411 = vector.extract_strided_slice %398 {offsets = [0, 64], sizes = [8, 32], strides = [1, 1]} : vector<8x128xf32> to vector<8x32xf32>
    %412 = math.tanh %411 : vector<8x32xf32>
    %413 = vector.extract_strided_slice %398 {offsets = [0, 96], sizes = [8, 32], strides = [1, 1]} : vector<8x128xf32> to vector<8x32xf32>
    %414 = arith.negf %413 : vector<8x32xf32>
    %415 = math.exp %414 : vector<8x32xf32>
    %cst_75 = arith.constant 1.000000e+00 : f32
    %416 = vector.broadcast %cst_75 : f32 to vector<8x32xf32>
    %417 = arith.addf %416, %415 : vector<8x32xf32>
    %418 = arith.divf %416, %417 : vector<8x32xf32>
    %419 = arith.mulf %410, %363 : vector<8x32xf32>
    %420 = arith.mulf %404, %412 : vector<8x32xf32>
    %421 = arith.addf %419, %420 : vector<8x32xf32>
    %422 = math.tanh %421 : vector<8x32xf32>
    %423 = arith.mulf %418, %422 : vector<8x32xf32>
    %424 = vector.extract_strided_slice %5 {offsets = [56, 0], sizes = [8, 128], strides = [1, 1]} : vector<64x128xf32> to vector<8x128xf32>
    %425 = arith.truncf %394 : vector<8x32xf32> to vector<8x32xbf16>
    %cst_76 = arith.constant dense<0.000000e+00> : vector<8x128xf32>
    %426 = tpu.matmul %425, %12, %cst_76 {dimension_numbers = #tpu.dot_dimension_numbers<[1], [0], [0], [1], [0, 0, 1, 1], [], []>} : vector<8x32xbf16>, vector<32x128xbf16>, vector<8x128xf32> -> vector<8x128xf32>
    %427 = arith.addf %424, %426 : vector<8x128xf32>
    %428 = vector.extract_strided_slice %427 {offsets = [0, 0], sizes = [8, 32], strides = [1, 1]} : vector<8x128xf32> to vector<8x32xf32>
    %429 = arith.negf %428 : vector<8x32xf32>
    %430 = math.exp %429 : vector<8x32xf32>
    %cst_77 = arith.constant 1.000000e+00 : f32
    %431 = vector.broadcast %cst_77 : f32 to vector<8x32xf32>
    %432 = arith.addf %431, %430 : vector<8x32xf32>
    %433 = arith.divf %431, %432 : vector<8x32xf32>
    %434 = vector.extract_strided_slice %427 {offsets = [0, 32], sizes = [8, 32], strides = [1, 1]} : vector<8x128xf32> to vector<8x32xf32>
    %435 = arith.negf %434 : vector<8x32xf32>
    %436 = math.exp %435 : vector<8x32xf32>
    %cst_78 = arith.constant 1.000000e+00 : f32
    %437 = vector.broadcast %cst_78 : f32 to vector<8x32xf32>
    %438 = arith.addf %437, %436 : vector<8x32xf32>
    %439 = arith.divf %437, %438 : vector<8x32xf32>
    %440 = vector.extract_strided_slice %427 {offsets = [0, 64], sizes = [8, 32], strides = [1, 1]} : vector<8x128xf32> to vector<8x32xf32>
    %441 = math.tanh %440 : vector<8x32xf32>
    %442 = vector.extract_strided_slice %427 {offsets = [0, 96], sizes = [8, 32], strides = [1, 1]} : vector<8x128xf32> to vector<8x32xf32>
    %443 = arith.negf %442 : vector<8x32xf32>
    %444 = math.exp %443 : vector<8x32xf32>
    %cst_79 = arith.constant 1.000000e+00 : f32
    %445 = vector.broadcast %cst_79 : f32 to vector<8x32xf32>
    %446 = arith.addf %445, %444 : vector<8x32xf32>
    %447 = arith.divf %445, %446 : vector<8x32xf32>
    %448 = arith.mulf %439, %392 : vector<8x32xf32>
    %449 = arith.mulf %433, %441 : vector<8x32xf32>
    %450 = arith.addf %448, %449 : vector<8x32xf32>
    %451 = math.tanh %450 : vector<8x32xf32>
    %452 = arith.mulf %447, %451 : vector<8x32xf32>
    %453 = vector.extract_strided_slice %11 {offsets = [56, 0], sizes = [8, 128], strides = [1, 1]} : vector<64x128xf32> to vector<8x128xf32>
    %454 = arith.truncf %423 : vector<8x32xf32> to vector<8x32xbf16>
    %cst_80 = arith.constant dense<0.000000e+00> : vector<8x128xf32>
    %455 = tpu.matmul %454, %13, %cst_80 {dimension_numbers = #tpu.dot_dimension_numbers<[1], [0], [0], [1], [0, 0, 1, 1], [], []>} : vector<8x32xbf16>, vector<32x128xbf16>, vector<8x128xf32> -> vector<8x128xf32>
    %456 = arith.addf %453, %455 : vector<8x128xf32>
    %457 = vector.extract_strided_slice %456 {offsets = [0, 0], sizes = [8, 32], strides = [1, 1]} : vector<8x128xf32> to vector<8x32xf32>
    %458 = arith.negf %457 : vector<8x32xf32>
    %459 = math.exp %458 : vector<8x32xf32>
    %cst_81 = arith.constant 1.000000e+00 : f32
    %460 = vector.broadcast %cst_81 : f32 to vector<8x32xf32>
    %461 = arith.addf %460, %459 : vector<8x32xf32>
    %462 = arith.divf %460, %461 : vector<8x32xf32>
    %463 = vector.extract_strided_slice %456 {offsets = [0, 32], sizes = [8, 32], strides = [1, 1]} : vector<8x128xf32> to vector<8x32xf32>
    %464 = arith.negf %463 : vector<8x32xf32>
    %465 = math.exp %464 : vector<8x32xf32>
    %cst_82 = arith.constant 1.000000e+00 : f32
    %466 = vector.broadcast %cst_82 : f32 to vector<8x32xf32>
    %467 = arith.addf %466, %465 : vector<8x32xf32>
    %468 = arith.divf %466, %467 : vector<8x32xf32>
    %469 = vector.extract_strided_slice %456 {offsets = [0, 64], sizes = [8, 32], strides = [1, 1]} : vector<8x128xf32> to vector<8x32xf32>
    %470 = math.tanh %469 : vector<8x32xf32>
    %471 = vector.extract_strided_slice %456 {offsets = [0, 96], sizes = [8, 32], strides = [1, 1]} : vector<8x128xf32> to vector<8x32xf32>
    %472 = arith.negf %471 : vector<8x32xf32>
    %473 = math.exp %472 : vector<8x32xf32>
    %cst_83 = arith.constant 1.000000e+00 : f32
    %474 = vector.broadcast %cst_83 : f32 to vector<8x32xf32>
    %475 = arith.addf %474, %473 : vector<8x32xf32>
    %476 = arith.divf %474, %475 : vector<8x32xf32>
    %477 = arith.mulf %468, %421 : vector<8x32xf32>
    %478 = arith.mulf %462, %470 : vector<8x32xf32>
    %479 = arith.addf %477, %478 : vector<8x32xf32>
    %480 = math.tanh %479 : vector<8x32xf32>
    %481 = arith.mulf %476, %480 : vector<8x32xf32>
    %482 = tpu.concatenate %46, %104, %162, %220, %278, %336, %394, %452 in 0 : vector<8x32xf32>, vector<8x32xf32>, vector<8x32xf32>, vector<8x32xf32>, vector<8x32xf32>, vector<8x32xf32>, vector<8x32xf32>, vector<8x32xf32> -> vector<64x32xf32>
    %c0_84 = arith.constant 0 : index
    %c0_85 = arith.constant 0 : index
    %483 = vector.load %arg8[%c0_84, %c0_85] : memref<64x32xf32, #tpu.memory_space<vmem>>, vector<64x32xf32>
    tpu.vector_store %arg8[%c0_84, %c0_85], %482 {strides = array<i32>} : memref<64x32xf32, #tpu.memory_space<vmem>>, vector<64x32xf32>,
    %484 = tpu.concatenate %75, %133, %191, %249, %307, %365, %423, %481 in 0 : vector<8x32xf32>, vector<8x32xf32>, vector<8x32xf32>, vector<8x32xf32>, vector<8x32xf32>, vector<8x32xf32>, vector<8x32xf32>, vector<8x32xf32> -> vector<64x32xf32>
    %c0_86 = arith.constant 0 : index
    %c0_87 = arith.constant 0 : index
    %485 = vector.load %arg9[%c0_86, %c0_87] : memref<64x32xf32, #tpu.memory_space<vmem>>, vector<64x32xf32>
    tpu.vector_store %arg9[%c0_86, %c0_87], %484 {strides = array<i32>} : memref<64x32xf32, #tpu.memory_space<vmem>>, vector<64x32xf32>,
    return
  }
}

</mosaic_0001>

<llo_original>
// kernel: tpu_custom_call.1
$region0: #{tpu_custom_call.1}
  #allocation0 [shape = 'u32[]', space=smem, size = 0x4, offset = 0x4, fixed_abs, tag = 'smem constant byte address 0x4 - core index']
  #allocation1 [shape = 'u32[144,128]{1,0:T(1,128)}', space=vmem, size = 0x12000, scoped, tag = 'internal scratch']
  %s0 = inlined_call_operand.hbm [shape: bf16[64,64], index: 0, kind: input, shape index: {}]
  %s1 = inlined_call_operand.hbm [shape: bf16[64,64], index: 1, kind: input, shape index: {}]
  %s2 = inlined_call_operand.hbm [shape: bf16[64,128], index: 2, kind: input, shape index: {}]
  %s3 = inlined_call_operand.hbm [shape: bf16[32,128], index: 3, kind: input, shape index: {}]
  %s4 = inlined_call_operand.vmem [shape: f32[1,128], index: 4, kind: input, shape index: {}]
  %s5 = inlined_call_operand.hbm [shape: bf16[64,128], index: 5, kind: input, shape index: {}]
  %s6 = inlined_call_operand.vmem [shape: bf16[32,128], index: 6, kind: input, shape index: {}]
  %s7 = inlined_call_operand.vmem [shape: f32[1,128], index: 7, kind: input, shape index: {}]
  %s8 = inlined_call_operand.vmem [shape: f32[64,32], index: 8, kind: output, shape index: {0}]
  %s9 = inlined_call_operand.vmem [shape: f32[64,32], index: 9, kind: output, shape index: {1}]
  %10 = xla_tuple %s8, %s9
  %s11 = sld [smem:[#allocation0]]
  $region70: #{tpu_custom_call.1} parent=0
    _
  %s13 = ssub.s32 1, %s11
  %s14 = scalar_select 0, %s13, %s11
  $region1: #{tpu_custom_call.1} parent=0
    #allocation2 [shape = 'u8[16384]{0}', space=vmem, size = 0x4000, scoped, tag = 'input window, operand 0, single buffered']
    #allocation3 [shape = 's32[1]{0}', space=sflag, size = 0x4, scoped, tag = 'scoped memory for tpu_custom_call.1']
    #allocation4 [shape = 'u8[16384]{0}', space=vmem, size = 0x4000, scoped, tag = 'input window, operand 1, single buffered']
    #allocation5 [shape = 's32[1]{0}', space=sflag, size = 0x4, scoped, tag = 'scoped memory for tpu_custom_call.1']
    #allocation6 [shape = 'u8[16384]{0}', space=vmem, size = 0x4000, scoped, tag = 'input window, operand 2, single buffered']
    #allocation7 [shape = 'u8[8192]{0}', space=vmem, size = 0x2000, scoped, tag = 'input window, operand 3, single buffered']
    #allocation8 [shape = 's32[1]{0}', space=sflag, size = 0x4, scoped, tag = 'scoped memory for tpu_custom_call.1']
    #allocation9 [shape = 'u8[16384]{0}', space=vmem, size = 0x4000, scoped, tag = 'input window, operand 5, single buffered']
    %15 = vsyncpa [#allocation3], 0
    %16 = vsyncpa [#allocation5], 0
    %17 = vsyncpa [#allocation8], 0
    // Predicated region
    $region2: #{tpu_custom_call.1} parent=1 // pred_check
      _
    $region3: #{tpu_custom_call.1} parent=1 // pred_check_branch
      %19 = sbr.rel (0) target = $region5
    $region4: #{tpu_custom_call.1} parent=1 // pred_region
      %s21 = ssub.s32 512, 512
      %22 = vsyncadd [#allocation3], %s21
      %s23 = sshll.u32 [#allocation2], 4
      %s24 = int_to_ptr.vmem [resolvable:$true] %s23
      %29 = dma.hbm_to_vmem [thread:$0]  %s0, 512, %s24, [#allocation3], 64, 64, 4
    $region5: #{tpu_custom_call.1} parent=1 // pred_fallthru
      _
    // Predicated region
    $region6: #{tpu_custom_call.1} parent=1 // pred_check
      _
    $region7: #{tpu_custom_call.1} parent=1 // pred_check_branch
      %31 = sbr.rel (0) target = $region9
    $region8: #{tpu_custom_call.1} parent=1 // pred_region
      %s33 = ssub.s32 512, 512
      %34 = vsyncadd [#allocation5], %s33
      %s35 = sshll.u32 [#allocation4], 4
      %s36 = int_to_ptr.vmem [resolvable:$true] %s35
      %41 = dma.hbm_to_vmem [thread:$0]  %s1, 512, %s36, [#allocation5], 64, 64, 4
    $region9: #{tpu_custom_call.1} parent=1 // pred_fallthru
      _
    // Predicated region
    $region10: #{tpu_custom_call.1} parent=1 // pred_check
      _
    $region11: #{tpu_custom_call.1} parent=1 // pred_check_branch
      %43 = sbr.rel (0) target = $region13
    $region12: #{tpu_custom_call.1} parent=1 // pred_region
      %s45 = ssub.s32 512, 512
      %46 = vsyncadd [#allocation5], %s45
      %s47 = sshll.u32 [#allocation6], 4
      %s48 = int_to_ptr.vmem [resolvable:$true] %s47
      %53 = dma.hbm_to_vmem [thread:$0]  %s2, 512, %s48, [#allocation5], 64, 64, 4
    $region13: #{tpu_custom_call.1} parent=1 // pred_fallthru
      _
    // Predicated region
    $region14: #{tpu_custom_call.1} parent=1 // pred_check
      _
    $region15: #{tpu_custom_call.1} parent=1 // pred_check_branch
      %55 = sbr.rel (0) target = $region17
    $region16: #{tpu_custom_call.1} parent=1 // pred_region
      %s57 = ssub.s32 256, 256
      %58 = vsyncadd [#allocation8], %s57
      %s59 = sshll.u32 [#allocation7], 4
      %s60 = int_to_ptr.vmem [resolvable:$true] %s59
      %65 = dma.hbm_to_vmem [thread:$0]  %s3, 256, %s60, [#allocation8], 64, 64, 4
    $region17: #{tpu_custom_call.1} parent=1 // pred_fallthru
      _
    // Predicated region
    $region18: #{tpu_custom_call.1} parent=1 // pred_check
      _
    $region19: #{tpu_custom_call.1} parent=1 // pred_check_branch
      %67 = sbr.rel (0) target = $region21
    $region20: #{tpu_custom_call.1} parent=1 // pred_region
      _
    $region21: #{tpu_custom_call.1} parent=1 // pred_fallthru
      _
    // Predicated region
    $region22: #{tpu_custom_call.1} parent=1 // pred_check
      _
    $region23: #{tpu_custom_call.1} parent=1 // pred_check_branch
      %69 = sbr.rel (0) target = $region25
    $region24: #{tpu_custom_call.1} parent=1 // pred_region
      %s71 = ssub.s32 512, 512
      %72 = vsyncadd [#allocation8], %s71
      %s73 = sshll.u32 [#allocation9], 4
      %s74 = int_to_ptr.vmem [resolvable:$true] %s73
      %79 = dma.hbm_to_vmem [thread:$0]  %s5, 512, %s74, [#allocation8], 64, 64, 4
    $region25: #{tpu_custom_call.1} parent=1 // pred_fallthru
      _
    // Predicated region
    $region26: #{tpu_custom_call.1} parent=1 // pred_check
      _
    $region27: #{tpu_custom_call.1} parent=1 // pred_check_branch
      %81 = sbr.rel (0) target = $region29
    $region28: #{tpu_custom_call.1} parent=1 // pred_region
      _
    $region29: #{tpu_custom_call.1} parent=1 // pred_fallthru
      _
    // Predicated region
    $region30: #{tpu_custom_call.1} parent=1 // pred_check
      _
    $region31: #{tpu_custom_call.1} parent=1 // pred_check_branch
      %83 = sbr.rel (0) target = $region33
    $region32: #{tpu_custom_call.1} parent=1 // pred_region
      _
    $region33: #{tpu_custom_call.1} parent=1 // pred_fallthru
      _
    // Predicated region
    $region34: #{tpu_custom_call.1} parent=1 // pred_check
      _
    $region35: #{tpu_custom_call.1} parent=1 // pred_check_branch
      %85 = sbr.rel (0) target = $region37
    $region36: #{tpu_custom_call.1} parent=1 // pred_region
      %86 = dma.done [#allocation3], 512
    $region37: #{tpu_custom_call.1} parent=1 // pred_fallthru
      _
    // Predicated region
    $region38: #{tpu_custom_call.1} parent=1 // pred_check
      _
    $region39: #{tpu_custom_call.1} parent=1 // pred_check_branch
      %88 = sbr.rel (0) target = $region41
    $region40: #{tpu_custom_call.1} parent=1 // pred_region
      %89 = dma.done [#allocation5], 512
    $region41: #{tpu_custom_call.1} parent=1 // pred_fallthru
      _
    // Predicated region
    $region42: #{tpu_custom_call.1} parent=1 // pred_check
      _
    $region43: #{tpu_custom_call.1} parent=1 // pred_check_branch
      %91 = sbr.rel (0) target = $region45
    $region44: #{tpu_custom_call.1} parent=1 // pred_region
      %92 = dma.done [#allocation5], 512
    $region45: #{tpu_custom_call.1} parent=1 // pred_fallthru
      _
    // Predicated region
    $region46: #{tpu_custom_call.1} parent=1 // pred_check
      _
    $region47: #{tpu_custom_call.1} parent=1 // pred_check_branch
      %94 = sbr.rel (0) target = $region49
    $region48: #{tpu_custom_call.1} parent=1 // pred_region
      %95 = dma.done [#allocation8], 256
    $region49: #{tpu_custom_call.1} parent=1 // pred_fallthru
      _
    // Predicated region
    $region50: #{tpu_custom_call.1} parent=1 // pred_check
      _
    $region51: #{tpu_custom_call.1} parent=1 // pred_check_branch
      %97 = sbr.rel (0) target = $region53
    $region52: #{tpu_custom_call.1} parent=1 // pred_region
      %98 = dma.done [#allocation8], 512
    $region53: #{tpu_custom_call.1} parent=1 // pred_fallthru
      _
    %v100 = vld [vmem:[#allocation2] sm:$0xf]
    %v101 = vld [vmem:[#allocation2 + $0x4] sm:$0xf]
    %v102 = vld [vmem:[#allocation2 + $0x8] sm:$0xf]
    %v103 = vld [vmem:[#allocation2 + $0xc] sm:$0xf]
    %v104 = vld [vmem:[#allocation2 + $0x10] sm:$0xf]
    %v105 = vld [vmem:[#allocation2 + $0x14] sm:$0xf]
    %v106 = vld [vmem:[#allocation2 + $0x18] sm:$0xf]
    %v107 = vld [vmem:[#allocation2 + $0x1c] sm:$0xf]
    %v108 = vld [vmem:[#allocation6] sm:$0xf]
    %v109 = vld [vmem:[#allocation6 + $0x4] sm:$0xf]
    %v110 = vld [vmem:[#allocation6 + $0x8] sm:$0xf]
    %v111 = vld [vmem:[#allocation6 + $0xc] sm:$0xf]
    %v112 = vld [vmem:[#allocation6 + $0x10] sm:$0xf]
    %v113 = vld [vmem:[#allocation6 + $0x14] sm:$0xf]
    %v114 = vld [vmem:[#allocation6 + $0x18] sm:$0xf]
    %v115 = vld [vmem:[#allocation6 + $0x1c] sm:$0xf]
    %v116 = vld [vmem:[%s4] sm:$0x1]
    %v118 = vlaneseq
    %v119 = vshrl.u32 %v118, 7
    %v120 = vsub.s32 0, %v119
    %v121 = vrot.slane %v116, %v120
    %v131 = vunpack.c.l.b16 %v100
    %v132 = vunpack.c.l.b16 %v101
    %v133 = vunpack.c.l.b16 %v102
    %v134 = vunpack.c.l.b16 %v103
    %v135 = vunpack.c.l.b16 %v104
    %v136 = vunpack.c.l.b16 %v105
    %v137 = vunpack.c.l.b16 %v106
    %v138 = vunpack.c.l.b16 %v107
    %v139 = vpack.c.b16 %v132, %v131
    %v140 = vpack.c.b16 %v134, %v133
    %v141 = vpack.c.b16 %v136, %v135
    %v142 = vpack.c.b16 %v138, %v137
    %v151 = vunpack.c.l.b16 %v108
    %v152 = vunpack.c.l.b16 %v109
    %v153 = vunpack.c.l.b16 %v110
    %v154 = vunpack.c.l.b16 %v111
    %v155 = vunpack.c.l.b16 %v112
    %v156 = vunpack.c.l.b16 %v113
    %v157 = vunpack.c.l.b16 %v114
    %v158 = vunpack.c.l.b16 %v115
    %v159 = vpack.c.b16 %v152, %v151
    %v160 = vpack.c.b16 %v154, %v153
    %v161 = vpack.c.b16 %v156, %v155
    %v162 = vpack.c.b16 %v158, %v157
    %vm167 = vcmask 523264
    %v169 = vsel %vm167, %v139, 0
    %v172 = vsel %vm167, %v140, 0
    %v175 = vsel %vm167, %v141, 0
    %v178 = vsel %vm167, %v142, 0
    %180 = vmatprep.subr.bf16.mxu0 0
    %181 = vmatpush1.bf16.msra.mxu0 %v159
    %182 = vmatprep.subr.bf16.mxu0 0
    %183 = vmatpush1.bf16.msra.mxu0 %v160
    %184 = vmatprep.subr.bf16.mxu0 0
    %185 = vmatpush1.bf16.msra.mxu0 %v161
    %186 = vmatprep.subr.bf16.mxu0 0
    %187 = vmatpush1.bf16.msra.mxu0 %v162
    %188 = vmatprep.subr.bf16.mxu0 0
    %189 = vmatpush1.bf16.msra.mxu0 0
    %190 = vmatprep.subr.bf16.mxu0 0
    %191 = vmatpush1.bf16.msra.mxu0 0
    %192 = vmatprep.subr.bf16.mxu0 0
    %193 = vmatpush1.bf16.msra.mxu0 0
    %194 = vmatprep.subr.bf16.mxu0 0
    %195 = vmatpush1.bf16.msra.mxu0 0
    %196 = vmatprep.subr.bf16.mxu0 0
    %197 = vmatpush1.bf16.msra.mxu0 0
    %198 = vmatprep.subr.bf16.mxu0 0
    %199 = vmatpush1.bf16.msra.mxu0 0
    %200 = vmatprep.subr.bf16.mxu0 0
    %201 = vmatpush1.bf16.msra.mxu0 0
    %202 = vmatprep.subr.bf16.mxu0 0
    %203 = vmatpush1.bf16.msra.mxu0 0
    %204 = vmatprep.subr.bf16.mxu0 0
    %205 = vmatpush1.bf16.msra.mxu0 0
    %206 = vmatprep.subr.bf16.mxu0 0
    %207 = vmatpush1.bf16.msra.mxu0 0
    %208 = vmatprep.subr.bf16.mxu0 0
    %209 = vmatpush1.bf16.msra.mxu0 0
    %210 = vmatprep.subr.bf16.mxu0 0
    %211 = vmatpush1.bf16.msra.mxu0 0
    %212 = vmatprep.mubr.bf16.mxu0 0
    %213 = vmatmul.mubr.bf16.gmra.mrb[0].mxu0 %v169
    %v214 = vpop.f32.mrb[0].mxu0
    %v215 = vadd.f32 %v121, %v214
    %v216 = vpop.f32.mrb[0].mxu0
    %v217 = vpop.f32.mrb[0].mxu0
    %v218 = vadd.f32 %v121, %v217
    %v219 = vpop.f32.mrb[0].mxu0
    %220 = vmatprep.mubr.bf16.mxu0 0
    %221 = vmatmul.mubr.bf16.gmra.mrb[0].mxu0 %v172
    %v222 = vpop.f32.mrb[0].mxu0
    %v223 = vadd.f32 %v121, %v222
    %v224 = vpop.f32.mrb[0].mxu0
    %v225 = vpop.f32.mrb[0].mxu0
    %v226 = vadd.f32 %v121, %v225
    %v227 = vpop.f32.mrb[0].mxu0
    %228 = vmatprep.mubr.bf16.mxu0 0
    %229 = vmatmul.mubr.bf16.gmra.mrb[0].mxu0 %v175
    %v230 = vpop.f32.mrb[0].mxu0
    %v231 = vadd.f32 %v121, %v230
    %v232 = vpop.f32.mrb[0].mxu0
    %v233 = vpop.f32.mrb[0].mxu0
    %v234 = vadd.f32 %v121, %v233
    %v235 = vpop.f32.mrb[0].mxu0
    %236 = vmatprep.mubr.bf16.mxu0 0
    %237 = vmatmul.mubr.bf16.gmra.mrb[0].mxu0 %v178
    %v238 = vpop.f32.mrb[0].mxu0
    %v239 = vadd.f32 %v121, %v238
    %v240 = vpop.f32.mrb[0].mxu0
    %v241 = vpop.f32.mrb[0].mxu0
    %v242 = vadd.f32 %v121, %v241
    %v243 = vpop.f32.mrb[0].mxu0
    %244 = vdwg.mxu0
    %v245 = vld [vmem:[#allocation4] sm:$0xf]
    %v246 = vld [vmem:[#allocation4 + $0x4] sm:$0xf]
    %v247 = vld [vmem:[#allocation4 + $0x8] sm:$0xf]
    %v248 = vld [vmem:[#allocation4 + $0xc] sm:$0xf]
    %v249 = vld [vmem:[#allocation4 + $0x10] sm:$0xf]
    %v250 = vld [vmem:[#allocation4 + $0x14] sm:$0xf]
    %v251 = vld [vmem:[#allocation4 + $0x18] sm:$0xf]
    %v252 = vld [vmem:[#allocation4 + $0x1c] sm:$0xf]
    %v253 = vld [vmem:[#allocation9] sm:$0xf]
    %v254 = vld [vmem:[#allocation9 + $0x4] sm:$0xf]
    %v255 = vld [vmem:[#allocation9 + $0x8] sm:$0xf]
    %v256 = vld [vmem:[#allocation9 + $0xc] sm:$0xf]
    %v257 = vld [vmem:[#allocation9 + $0x10] sm:$0xf]
    %v258 = vld [vmem:[#allocation9 + $0x14] sm:$0xf]
    %v259 = vld [vmem:[#allocation9 + $0x18] sm:$0xf]
    %v260 = vld [vmem:[#allocation9 + $0x1c] sm:$0xf]
    %v261 = vld [vmem:[%s7] sm:$0x1]
    %v263 = vlaneseq
    %v264 = vshrl.u32 %v263, 7
    %v265 = vsub.s32 0, %v264
    %v266 = vrot.slane %v261, %v265
    %v276 = vunpack.c.l.b16 %v245
    %v277 = vunpack.c.l.b16 %v246
    %v278 = vunpack.c.l.b16 %v247
    %v279 = vunpack.c.l.b16 %v248
    %v280 = vunpack.c.l.b16 %v249
    %v281 = vunpack.c.l.b16 %v250
    %v282 = vunpack.c.l.b16 %v251
    %v283 = vunpack.c.l.b16 %v252
    %v284 = vpack.c.b16 %v277, %v276
    %v285 = vpack.c.b16 %v279, %v278
    %v286 = vpack.c.b16 %v281, %v280
    %v287 = vpack.c.b16 %v283, %v282
    %v296 = vunpack.c.l.b16 %v253
    %v297 = vunpack.c.l.b16 %v254
    %v298 = vunpack.c.l.b16 %v255
    %v299 = vunpack.c.l.b16 %v256
    %v300 = vunpack.c.l.b16 %v257
    %v301 = vunpack.c.l.b16 %v258
    %v302 = vunpack.c.l.b16 %v259
    %v303 = vunpack.c.l.b16 %v260
    %v304 = vpack.c.b16 %v297, %v296
    %v305 = vpack.c.b16 %v299, %v298
    %v306 = vpack.c.b16 %v301, %v300
    %v307 = vpack.c.b16 %v303, %v302
    %v313 = vsel %vm167, %v284, 0
    %v316 = vsel %vm167, %v285, 0
    %v319 = vsel %vm167, %v286, 0
    %v322 = vsel %vm167, %v287, 0
    %324 = vmatprep.subr.bf16.mxu0 0
    %325 = vmatpush1.bf16.msra.mxu0 %v304
    %326 = vmatprep.subr.bf16.mxu0 0
    %327 = vmatpush1.bf16.msra.mxu0 %v305
    %328 = vmatprep.subr.bf16.mxu0 0
    %329 = vmatpush1.bf16.msra.mxu0 %v306
    %330 = vmatprep.subr.bf16.mxu0 0
    %331 = vmatpush1.bf16.msra.mxu0 %v307
    %332 = vmatprep.subr.bf16.mxu0 0
    %333 = vmatpush1.bf16.msra.mxu0 0
    %334 = vmatprep.subr.bf16.mxu0 0
    %335 = vmatpush1.bf16.msra.mxu0 0
    %336 = vmatprep.subr.bf16.mxu0 0
    %337 = vmatpush1.bf16.msra.mxu0 0
    %338 = vmatprep.subr.bf16.mxu0 0
    %339 = vmatpush1.bf16.msra.mxu0 0
    %340 = vmatprep.subr.bf16.mxu0 0
    %341 = vmatpush1.bf16.msra.mxu0 0
    %342 = vmatprep.subr.bf16.mxu0 0
    %343 = vmatpush1.bf16.msra.mxu0 0
    %344 = vmatprep.subr.bf16.mxu0 0
    %345 = vmatpush1.bf16.msra.mxu0 0
    %346 = vmatprep.subr.bf16.mxu0 0
    %347 = vmatpush1.bf16.msra.mxu0 0
    %348 = vmatprep.subr.bf16.mxu0 0
    %349 = vmatpush1.bf16.msra.mxu0 0
    %350 = vmatprep.subr.bf16.mxu0 0
    %351 = vmatpush1.bf16.msra.mxu0 0
    %352 = vmatprep.subr.bf16.mxu0 0
    %353 = vmatpush1.bf16.msra.mxu0 0
    %354 = vmatprep.subr.bf16.mxu0 0
    %355 = vmatpush1.bf16.msra.mxu0 0
    %356 = vmatprep.mubr.bf16.mxu0 0
    %357 = vmatmul.mubr.bf16.gmra.mrb[0].mxu0 %v313
    %v358 = vpop.f32.mrb[0].mxu0
    %v359 = vadd.f32 %v266, %v358
    %v360 = vpop.f32.mrb[0].mxu0
    %v361 = vpop.f32.mrb[0].mxu0
    %v362 = vadd.f32 %v266, %v361
    %v363 = vpop.f32.mrb[0].mxu0
    %364 = vmatprep.mubr.bf16.mxu0 0
    %365 = vmatmul.mubr.bf16.gmra.mrb[0].mxu0 %v316
    %v366 = vpop.f32.mrb[0].mxu0
    %v367 = vadd.f32 %v266, %v366
    %v368 = vpop.f32.mrb[0].mxu0
    %v369 = vpop.f32.mrb[0].mxu0
    %v370 = vadd.f32 %v266, %v369
    %v371 = vpop.f32.mrb[0].mxu0
    %372 = vmatprep.mubr.bf16.mxu0 0
    %373 = vmatmul.mubr.bf16.gmra.mrb[0].mxu0 %v319
    %v374 = vpop.f32.mrb[0].mxu0
    %v375 = vadd.f32 %v266, %v374
    %v376 = vpop.f32.mrb[0].mxu0
    %v377 = vpop.f32.mrb[0].mxu0
    %v378 = vadd.f32 %v266, %v377
    %v379 = vpop.f32.mrb[0].mxu0
    %380 = vmatprep.mubr.bf16.mxu0 0
    %381 = vmatmul.mubr.bf16.gmra.mrb[0].mxu0 %v322
    %v382 = vpop.f32.mrb[0].mxu0
    %v383 = vadd.f32 %v266, %v382
    %v384 = vpop.f32.mrb[0].mxu0
    %v385 = vpop.f32.mrb[0].mxu0
    %v386 = vadd.f32 %v266, %v385
    %v387 = vpop.f32.mrb[0].mxu0
    %388 = vdwg.mxu0
    %v389 = vld [vmem:[#allocation7] sm:$0xf]
    %v390 = vld [vmem:[#allocation7 + $0x4] sm:$0xf]
    %v391 = vld [vmem:[#allocation7 + $0x8] sm:$0xf]
    %v392 = vld [vmem:[#allocation7 + $0xc] sm:$0xf]
    %v393 = vld [vmem:[%s6] sm:$0xf]
    %v394 = vld [vmem:[%s6 + $0x4] sm:$0xf]
    %v395 = vld [vmem:[%s6 + $0x8] sm:$0xf]
    %v396 = vld [vmem:[%s6 + $0xc] sm:$0xf]
    %v401 = vunpack.c.l.b16 %v389
    %v402 = vunpack.c.l.b16 %v390
    %v403 = vunpack.c.l.b16 %v391
    %v404 = vunpack.c.l.b16 %v392
    %v405 = vpack.c.b16 %v402, %v401
    %v406 = vpack.c.b16 %v404, %v403
    %vm409 = vcmask 261120
    %v411 = vsel %vm409, 0, 0
    %413 = vmatprep.subr.bf16.mxu0 0
    %414 = vmatpush1.bf16.msra.mxu0 %v405
    %415 = vmatprep.subr.bf16.mxu0 0
    %416 = vmatpush1.bf16.msra.mxu0 %v406
    %417 = vmatprep.subr.bf16.mxu0 0
    %418 = vmatpush1.bf16.msra.mxu0 0
    %419 = vmatprep.subr.bf16.mxu0 0
    %420 = vmatpush1.bf16.msra.mxu0 0
    %421 = vmatprep.subr.bf16.mxu0 0
    %422 = vmatpush1.bf16.msra.mxu0 0
    %423 = vmatprep.subr.bf16.mxu0 0
    %424 = vmatpush1.bf16.msra.mxu0 0
    %425 = vmatprep.subr.bf16.mxu0 0
    %426 = vmatpush1.bf16.msra.mxu0 0
    %427 = vmatprep.subr.bf16.mxu0 0
    %428 = vmatpush1.bf16.msra.mxu0 0
    %429 = vmatprep.subr.bf16.mxu0 0
    %430 = vmatpush1.bf16.msra.mxu0 0
    %431 = vmatprep.subr.bf16.mxu0 0
    %432 = vmatpush1.bf16.msra.mxu0 0
    %433 = vmatprep.subr.bf16.mxu0 0
    %434 = vmatpush1.bf16.msra.mxu0 0
    %435 = vmatprep.subr.bf16.mxu0 0
    %436 = vmatpush1.bf16.msra.mxu0 0
    %437 = vmatprep.subr.bf16.mxu0 0
    %438 = vmatpush1.bf16.msra.mxu0 0
    %439 = vmatprep.subr.bf16.mxu0 0
    %440 = vmatpush1.bf16.msra.mxu0 0
    %441 = vmatprep.subr.bf16.mxu0 0
    %442 = vmatpush1.bf16.msra.mxu0 0
    %443 = vmatprep.subr.bf16.mxu0 0
    %444 = vmatpush1.bf16.msra.mxu0 0
    %445 = vmatprep.mubr.bf16.mxu0 0
    %446 = vmatmul.mubr.bf16.gmra.mrb[0].mxu0 %v411
    %v447 = vpop.f32.mrb[0].mxu0
    %v448 = vadd.f32 0.0, %v447
    %v449 = vpop.f32.mrb[0].mxu0
    %v450 = vpop.f32.mrb[0].mxu0
    %v451 = vpop.f32.mrb[0].mxu0
    %452 = vdwg.mxu0
    %v453 = vadd.f32 %v215, %v448
    %v454 = vxor.u32 %v453, 2147483648
    %v455 = vmul.f32 %v454, 1.442695
    %v456 = vpow.pop %v455
    %v457 = vadd.f32 %v456, 1.0
    %v458 = vrcp.pop %v457
    %v459 = vmul.f32 1.0, %v458
    %v460 = vtanh.pop %v453
    %v461 = vmul.f32 %v459, 0.0
    %463 = vrot.lane.b32.xlu0 %v460, 64
    %v464 = vpop.permute.xlu0 %463
    %v466 = vmul.f32 %v459, %v464
    %468 = vrot.lane.b32.xlu0 %v466, 32
    %v469 = vpop.permute.xlu0 %468
    %v471 = vadd.f32 %v461, %v469
    %v472 = vtanh.pop %v471
    %474 = vrot.lane.b32.xlu0 %v472, 64
    %v475 = vpop.permute.xlu0 %474
    %v477 = vmul.f32 %v459, %v475
    %v482 = vunpack.c.l.b16 %v393
    %v483 = vunpack.c.l.b16 %v394
    %v484 = vunpack.c.l.b16 %v395
    %v485 = vunpack.c.l.b16 %v396
    %v486 = vpack.c.b16 %v483, %v482
    %v487 = vpack.c.b16 %v485, %v484
    %490 = vmatprep.subr.bf16.mxu0 0
    %491 = vmatpush1.bf16.msra.mxu0 %v486
    %492 = vmatprep.subr.bf16.mxu0 0
    %493 = vmatpush1.bf16.msra.mxu0 %v487
    %494 = vmatprep.subr.bf16.mxu0 0
    %495 = vmatpush1.bf16.msra.mxu0 0
    %496 = vmatprep.subr.bf16.mxu0 0
    %497 = vmatpush1.bf16.msra.mxu0 0
    %498 = vmatprep.subr.bf16.mxu0 0
    %499 = vmatpush1.bf16.msra.mxu0 0
    %500 = vmatprep.subr.bf16.mxu0 0
    %501 = vmatpush1.bf16.msra.mxu0 0
    %502 = vmatprep.subr.bf16.mxu0 0
    %503 = vmatpush1.bf16.msra.mxu0 0
    %504 = vmatprep.subr.bf16.mxu0 0
    %505 = vmatpush1.bf16.msra.mxu0 0
    %506 = vmatprep.subr.bf16.mxu0 0
    %507 = vmatpush1.bf16.msra.mxu0 0
    %508 = vmatprep.subr.bf16.mxu0 0
    %509 = vmatpush1.bf16.msra.mxu0 0
    %510 = vmatprep.subr.bf16.mxu0 0
    %511 = vmatpush1.bf16.msra.mxu0 0
    %512 = vmatprep.subr.bf16.mxu0 0
    %513 = vmatpush1.bf16.msra.mxu0 0
    %514 = vmatprep.subr.bf16.mxu0 0
    %515 = vmatpush1.bf16.msra.mxu0 0
    %516 = vmatprep.subr.bf16.mxu0 0
    %517 = vmatpush1.bf16.msra.mxu0 0
    %518 = vmatprep.subr.bf16.mxu0 0
    %519 = vmatpush1.bf16.msra.mxu0 0
    %520 = vmatprep.subr.bf16.mxu0 0
    %521 = vmatpush1.bf16.msra.mxu0 0
    %522 = vmatprep.mubr.bf16.mxu0 0
    %523 = vmatmul.mubr.bf16.gmra.mrb[0].mxu0 %v411
    %v524 = vpop.f32.mrb[0].mxu0
    %v525 = vadd.f32 0.0, %v524
    %v526 = vpop.f32.mrb[0].mxu0
    %v527 = vpop.f32.mrb[0].mxu0
    %v528 = vpop.f32.mrb[0].mxu0
    %529 = vdwg.mxu0
    %v530 = vadd.f32 %v359, %v525
    %v531 = vxor.u32 %v530, 2147483648
    %v532 = vmul.f32 %v531, 1.442695
    %v533 = vpow.pop %v532
    %v534 = vadd.f32 %v533, 1.0
    %v535 = vrcp.pop %v534
    %v536 = vmul.f32 1.0, %v535
    %v537 = vtanh.pop %v530
    %v538 = vmul.f32 %v536, 0.0
    %540 = vrot.lane.b32.xlu0 %v537, 64
    %v541 = vpop.permute.xlu0 %540
    %v543 = vmul.f32 %v536, %v541
    %545 = vrot.lane.b32.xlu0 %v543, 32
    %v546 = vpop.permute.xlu0 %545
    %v548 = vadd.f32 %v538, %v546
    %v549 = vtanh.pop %v548
    %551 = vrot.lane.b32.xlu0 %v549, 64
    %v552 = vpop.permute.xlu0 %551
    %v554 = vmul.f32 %v536, %v552
    %v555 = vpack.c.bf16 %v477, %v477
    %557 = vrot.lane.b32.xlu0 %v555, 32
    %v558 = vpop.permute.xlu0 %557
    %v560 = vsel %vm409, %v558, 0
    %562 = vmatprep.subr.bf16.mxu0 0
    %563 = vmatpush1.bf16.msra.mxu0 %v405
    %564 = vmatprep.subr.bf16.mxu0 0
    %565 = vmatpush1.bf16.msra.mxu0 %v406
    %566 = vmatprep.subr.bf16.mxu0 0
    %567 = vmatpush1.bf16.msra.mxu0 0
    %568 = vmatprep.subr.bf16.mxu0 0
    %569 = vmatpush1.bf16.msra.mxu0 0
    %570 = vmatprep.subr.bf16.mxu0 0
    %571 = vmatpush1.bf16.msra.mxu0 0
    %572 = vmatprep.subr.bf16.mxu0 0
    %573 = vmatpush1.bf16.msra.mxu0 0
    %574 = vmatprep.subr.bf16.mxu0 0
    %575 = vmatpush1.bf16.msra.mxu0 0
    %576 = vmatprep.subr.bf16.mxu0 0
    %577 = vmatpush1.bf16.msra.mxu0 0
    %578 = vmatprep.subr.bf16.mxu0 0
    %579 = vmatpush1.bf16.msra.mxu0 0
    %580 = vmatprep.subr.bf16.mxu0 0
    %581 = vmatpush1.bf16.msra.mxu0 0
    %582 = vmatprep.subr.bf16.mxu0 0
    %583 = vmatpush1.bf16.msra.mxu0 0
    %584 = vmatprep.subr.bf16.mxu0 0
    %585 = vmatpush1.bf16.msra.mxu0 0
    %586 = vmatprep.subr.bf16.mxu0 0
    %587 = vmatpush1.bf16.msra.mxu0 0
    %588 = vmatprep.subr.bf16.mxu0 0
    %589 = vmatpush1.bf16.msra.mxu0 0
    %590 = vmatprep.subr.bf16.mxu0 0
    %591 = vmatpush1.bf16.msra.mxu0 0
    %592 = vmatprep.subr.bf16.mxu0 0
    %593 = vmatpush1.bf16.msra.mxu0 0
    %594 = vmatprep.mubr.bf16.mxu0 0
    %595 = vmatmul.mubr.bf16.gmra.mrb[0].mxu0 %v560
    %v596 = vpop.f32.mrb[0].mxu0
    %v597 = vadd.f32 0.0, %v596
    %v598 = vpop.f32.mrb[0].mxu0
    %v599 = vpop.f32.mrb[0].mxu0
    %v600 = vpop.f32.mrb[0].mxu0
    %601 = vdwg.mxu0
    %v602 = vadd.f32 %v218, %v597
    %v603 = vxor.u32 %v602, 2147483648
    %v604 = vmul.f32 %v603, 1.442695
    %v605 = vpow.pop %v604
    %v606 = vadd.f32 %v605, 1.0
    %v607 = vrcp.pop %v606
    %v608 = vmul.f32 1.0, %v607
    %v609 = vtanh.pop %v602
    %v610 = vmul.f32 %v608, %v471
    %612 = vrot.lane.b32.xlu0 %v609, 64
    %v613 = vpop.permute.xlu0 %612
    %v615 = vmul.f32 %v608, %v613
    %617 = vrot.lane.b32.xlu0 %v615, 32
    %v618 = vpop.permute.xlu0 %617
    %v620 = vadd.f32 %v610, %v618
    %v621 = vtanh.pop %v620
    %623 = vrot.lane.b32.xlu0 %v621, 64
    %v624 = vpop.permute.xlu0 %623
    %v626 = vmul.f32 %v608, %v624
    %v627 = vpack.c.bf16 %v554, %v554
    %629 = vrot.lane.b32.xlu0 %v627, 32
    %v630 = vpop.permute.xlu0 %629
    %v632 = vsel %vm409, %v630, 0
    %634 = vmatprep.subr.bf16.mxu0 0
    %635 = vmatpush1.bf16.msra.mxu0 %v486
    %636 = vmatprep.subr.bf16.mxu0 0
    %637 = vmatpush1.bf16.msra.mxu0 %v487
    %638 = vmatprep.subr.bf16.mxu0 0
    %639 = vmatpush1.bf16.msra.mxu0 0
    %640 = vmatprep.subr.bf16.mxu0 0
    %641 = vmatpush1.bf16.msra.mxu0 0
    %642 = vmatprep.subr.bf16.mxu0 0
    %643 = vmatpush1.bf16.msra.mxu0 0
    %644 = vmatprep.subr.bf16.mxu0 0
    %645 = vmatpush1.bf16.msra.mxu0 0
    %646 = vmatprep.subr.bf16.mxu0 0
    %647 = vmatpush1.bf16.msra.mxu0 0
    %648 = vmatprep.subr.bf16.mxu0 0
    %649 = vmatpush1.bf16.msra.mxu0 0
    %650 = vmatprep.subr.bf16.mxu0 0
    %651 = vmatpush1.bf16.msra.mxu0 0
    %652 = vmatprep.subr.bf16.mxu0 0
    %653 = vmatpush1.bf16.msra.mxu0 0
    %654 = vmatprep.subr.bf16.mxu0 0
    %655 = vmatpush1.bf16.msra.mxu0 0
    %656 = vmatprep.subr.bf16.mxu0 0
    %657 = vmatpush1.bf16.msra.mxu0 0
    %658 = vmatprep.subr.bf16.mxu0 0
    %659 = vmatpush1.bf16.msra.mxu0 0
    %660 = vmatprep.subr.bf16.mxu0 0
    %661 = vmatpush1.bf16.msra.mxu0 0
    %662 = vmatprep.subr.bf16.mxu0 0
    %663 = vmatpush1.bf16.msra.mxu0 0
    %664 = vmatprep.subr.bf16.mxu0 0
    %665 = vmatpush1.bf16.msra.mxu0 0
    %666 = vmatprep.mubr.bf16.mxu0 0
    %667 = vmatmul.mubr.bf16.gmra.mrb[0].mxu0 %v632
    %v668 = vpop.f32.mrb[0].mxu0
    %v669 = vadd.f32 0.0, %v668
    %v670 = vpop.f32.mrb[0].mxu0
    %v671 = vpop.f32.mrb[0].mxu0
    %v672 = vpop.f32.mrb[0].mxu0
    %673 = vdwg.mxu0
    %v674 = vadd.f32 %v362, %v669
    %v675 = vxor.u32 %v674, 2147483648
    %v676 = vmul.f32 %v675, 1.442695
    %v677 = vpow.pop %v676
    %v678 = vadd.f32 %v677, 1.0
    %v679 = vrcp.pop %v678
    %v680 = vmul.f32 1.0, %v679
    %v681 = vtanh.pop %v674
    %v682 = vmul.f32 %v680, %v548
    %684 = vrot.lane.b32.xlu0 %v681, 64
    %v685 = vpop.permute.xlu0 %684
    %v687 = vmul.f32 %v680, %v685
    %689 = vrot.lane.b32.xlu0 %v687, 32
    %v690 = vpop.permute.xlu0 %689
    %v692 = vadd.f32 %v682, %v690
    %v693 = vtanh.pop %v692
    %695 = vrot.lane.b32.xlu0 %v693, 64
    %v696 = vpop.permute.xlu0 %695
    %v698 = vmul.f32 %v680, %v696
    %v699 = vpack.c.bf16 %v626, %v626
    %701 = vrot.lane.b32.xlu0 %v699, 32
    %v702 = vpop.permute.xlu0 %701
    %v704 = vsel %vm409, %v702, 0
    %706 = vmatprep.subr.bf16.mxu0 0
    %707 = vmatpush1.bf16.msra.mxu0 %v405
    %708 = vmatprep.subr.bf16.mxu0 0
    %709 = vmatpush1.bf16.msra.mxu0 %v406
    %710 = vmatprep.subr.bf16.mxu0 0
    %711 = vmatpush1.bf16.msra.mxu0 0
    %712 = vmatprep.subr.bf16.mxu0 0
    %713 = vmatpush1.bf16.msra.mxu0 0
    %714 = vmatprep.subr.bf16.mxu0 0
    %715 = vmatpush1.bf16.msra.mxu0 0
    %716 = vmatprep.subr.bf16.mxu0 0
    %717 = vmatpush1.bf16.msra.mxu0 0
    %718 = vmatprep.subr.bf16.mxu0 0
    %719 = vmatpush1.bf16.msra.mxu0 0
    %720 = vmatprep.subr.bf16.mxu0 0
    %721 = vmatpush1.bf16.msra.mxu0 0
    %722 = vmatprep.subr.bf16.mxu0 0
    %723 = vmatpush1.bf16.msra.mxu0 0
    %724 = vmatprep.subr.bf16.mxu0 0
    %725 = vmatpush1.bf16.msra.mxu0 0
    %726 = vmatprep.subr.bf16.mxu0 0
    %727 = vmatpush1.bf16.msra.mxu0 0
    %728 = vmatprep.subr.bf16.mxu0 0
    %729 = vmatpush1.bf16.msra.mxu0 0
    %730 = vmatprep.subr.bf16.mxu0 0
    %731 = vmatpush1.bf16.msra.mxu0 0
    %732 = vmatprep.subr.bf16.mxu0 0
    %733 = vmatpush1.bf16.msra.mxu0 0
    %734 = vmatprep.subr.bf16.mxu0 0
    %735 = vmatpush1.bf16.msra.mxu0 0
    %736 = vmatprep.subr.bf16.mxu0 0
    %737 = vmatpush1.bf16.msra.mxu0 0
    %738 = vmatprep.mubr.bf16.mxu0 0
    %739 = vmatmul.mubr.bf16.gmra.mrb[0].mxu0 %v704
    %v740 = vpop.f32.mrb[0].mxu0
    %v741 = vadd.f32 0.0, %v740
    %v742 = vpop.f32.mrb[0].mxu0
    %v743 = vpop.f32.mrb[0].mxu0
    %v744 = vpop.f32.mrb[0].mxu0
    %745 = vdwg.mxu0
    %v746 = vadd.f32 %v223, %v741
    %v747 = vxor.u32 %v746, 2147483648
    %v748 = vmul.f32 %v747, 1.442695
    %v749 = vpow.pop %v748
    %v750 = vadd.f32 %v749, 1.0
    %v751 = vrcp.pop %v750
    %v752 = vmul.f32 1.0, %v751
    %v753 = vtanh.pop %v746
    %v754 = vmul.f32 %v752, %v620
    %756 = vrot.lane.b32.xlu0 %v753, 64
    %v757 = vpop.permute.xlu0 %756
    %v759 = vmul.f32 %v752, %v757
    %761 = vrot.lane.b32.xlu0 %v759, 32
    %v762 = vpop.permute.xlu0 %761
    %v764 = vadd.f32 %v754, %v762
    %v765 = vtanh.pop %v764
    %767 = vrot.lane.b32.xlu0 %v765, 64
    %v768 = vpop.permute.xlu0 %767
    %v770 = vmul.f32 %v752, %v768
    %v771 = vpack.c.bf16 %v698, %v698
    %773 = vrot.lane.b32.xlu0 %v771, 32
    %v774 = vpop.permute.xlu0 %773
    %v776 = vsel %vm409, %v774, 0
    %778 = vmatprep.subr.bf16.mxu0 0
    %779 = vmatpush1.bf16.msra.mxu0 %v486
    %780 = vmatprep.subr.bf16.mxu0 0
    %781 = vmatpush1.bf16.msra.mxu0 %v487
    %782 = vmatprep.subr.bf16.mxu0 0
    %783 = vmatpush1.bf16.msra.mxu0 0
    %784 = vmatprep.subr.bf16.mxu0 0
    %785 = vmatpush1.bf16.msra.mxu0 0
    %786 = vmatprep.subr.bf16.mxu0 0
    %787 = vmatpush1.bf16.msra.mxu0 0
    %788 = vmatprep.subr.bf16.mxu0 0
    %789 = vmatpush1.bf16.msra.mxu0 0
    %790 = vmatprep.subr.bf16.mxu0 0
    %791 = vmatpush1.bf16.msra.mxu0 0
    %792 = vmatprep.subr.bf16.mxu0 0
    %793 = vmatpush1.bf16.msra.mxu0 0
    %794 = vmatprep.subr.bf16.mxu0 0
    %795 = vmatpush1.bf16.msra.mxu0 0
    %796 = vmatprep.subr.bf16.mxu0 0
    %797 = vmatpush1.bf16.msra.mxu0 0
    %798 = vmatprep.subr.bf16.mxu0 0
    %799 = vmatpush1.bf16.msra.mxu0 0
    %800 = vmatprep.subr.bf16.mxu0 0
    %801 = vmatpush1.bf16.msra.mxu0 0
    %802 = vmatprep.subr.bf16.mxu0 0
    %803 = vmatpush1.bf16.msra.mxu0 0
    %804 = vmatprep.subr.bf16.mxu0 0
    %805 = vmatpush1.bf16.msra.mxu0 0
    %806 = vmatprep.subr.bf16.mxu0 0
    %807 = vmatpush1.bf16.msra.mxu0 0
    %808 = vmatprep.subr.bf16.mxu0 0
    %809 = vmatpush1.bf16.msra.mxu0 0
    %810 = vmatprep.mubr.bf16.mxu0 0
    %811 = vmatmul.mubr.bf16.gmra.mrb[0].mxu0 %v776
    %v812 = vpop.f32.mrb[0].mxu0
    %v813 = vadd.f32 0.0, %v812
    %v814 = vpop.f32.mrb[0].mxu0
    %v815 = vpop.f32.mrb[0].mxu0
    %v816 = vpop.f32.mrb[0].mxu0
    %817 = vdwg.mxu0
    %v818 = vadd.f32 %v367, %v813
    %v819 = vxor.u32 %v818, 2147483648
    %v820 = vmul.f32 %v819, 1.442695
    %v821 = vpow.pop %v820
    %v822 = vadd.f32 %v821, 1.0
    %v823 = vrcp.pop %v822
    %v824 = vmul.f32 1.0, %v823
    %v825 = vtanh.pop %v818
    %v826 = vmul.f32 %v824, %v692
    %828 = vrot.lane.b32.xlu0 %v825, 64
    %v829 = vpop.permute.xlu0 %828
    %v831 = vmul.f32 %v824, %v829
    %833 = vrot.lane.b32.xlu0 %v831, 32
    %v834 = vpop.permute.xlu0 %833
    %v836 = vadd.f32 %v826, %v834
    %v837 = vtanh.pop %v836
    %839 = vrot.lane.b32.xlu0 %v837, 64
    %v840 = vpop.permute.xlu0 %839
    %v842 = vmul.f32 %v824, %v840
    %v843 = vpack.c.bf16 %v770, %v770
    %845 = vrot.lane.b32.xlu0 %v843, 32
    %v846 = vpop.permute.xlu0 %845
    %v848 = vsel %vm409, %v846, 0
    %850 = vmatprep.subr.bf16.mxu0 0
    %851 = vmatpush1.bf16.msra.mxu0 %v405
    %852 = vmatprep.subr.bf16.mxu0 0
    %853 = vmatpush1.bf16.msra.mxu0 %v406
    %854 = vmatprep.subr.bf16.mxu0 0
    %855 = vmatpush1.bf16.msra.mxu0 0
    %856 = vmatprep.subr.bf16.mxu0 0
    %857 = vmatpush1.bf16.msra.mxu0 0
    %858 = vmatprep.subr.bf16.mxu0 0
    %859 = vmatpush1.bf16.msra.mxu0 0
    %860 = vmatprep.subr.bf16.mxu0 0
    %861 = vmatpush1.bf16.msra.mxu0 0
    %862 = vmatprep.subr.bf16.mxu0 0
    %863 = vmatpush1.bf16.msra.mxu0 0
    %864 = vmatprep.subr.bf16.mxu0 0
    %865 = vmatpush1.bf16.msra.mxu0 0
    %866 = vmatprep.subr.bf16.mxu0 0
    %867 = vmatpush1.bf16.msra.mxu0 0
    %868 = vmatprep.subr.bf16.mxu0 0
    %869 = vmatpush1.bf16.msra.mxu0 0
    %870 = vmatprep.subr.bf16.mxu0 0
    %871 = vmatpush1.bf16.msra.mxu0 0
    %872 = vmatprep.subr.bf16.mxu0 0
    %873 = vmatpush1.bf16.msra.mxu0 0
    %874 = vmatprep.subr.bf16.mxu0 0
    %875 = vmatpush1.bf16.msra.mxu0 0
    %876 = vmatprep.subr.bf16.mxu0 0
    %877 = vmatpush1.bf16.msra.mxu0 0
    %878 = vmatprep.subr.bf16.mxu0 0
    %879 = vmatpush1.bf16.msra.mxu0 0
    %880 = vmatprep.subr.bf16.mxu0 0
    %881 = vmatpush1.bf16.msra.mxu0 0
    %882 = vmatprep.mubr.bf16.mxu0 0
    %883 = vmatmul.mubr.bf16.gmra.mrb[0].mxu0 %v848
    %v884 = vpop.f32.mrb[0].mxu0
    %v885 = vadd.f32 0.0, %v884
    %v886 = vpop.f32.mrb[0].mxu0
    %v887 = vpop.f32.mrb[0].mxu0
    %v888 = vpop.f32.mrb[0].mxu0
    %889 = vdwg.mxu0
    %v890 = vadd.f32 %v226, %v885
    %v891 = vxor.u32 %v890, 2147483648
    %v892 = vmul.f32 %v891, 1.442695
    %v893 = vpow.pop %v892
    %v894 = vadd.f32 %v893, 1.0
    %v895 = vrcp.pop %v894
    %v896 = vmul.f32 1.0, %v895
    %v897 = vtanh.pop %v890
    %v898 = vmul.f32 %v896, %v764
    %900 = vrot.lane.b32.xlu0 %v897, 64
    %v901 = vpop.permute.xlu0 %900
    %v903 = vmul.f32 %v896, %v901
    %905 = vrot.lane.b32.xlu0 %v903, 32
    %v906 = vpop.permute.xlu0 %905
    %v908 = vadd.f32 %v898, %v906
    %v909 = vtanh.pop %v908
    %911 = vrot.lane.b32.xlu0 %v909, 64
    %v912 = vpop.permute.xlu0 %911
    %v914 = vmul.f32 %v896, %v912
    %v915 = vpack.c.bf16 %v842, %v842
    %917 = vrot.lane.b32.xlu0 %v915, 32
    %v918 = vpop.permute.xlu0 %917
    %v920 = vsel %vm409, %v918, 0
    %922 = vmatprep.subr.bf16.mxu0 0
    %923 = vmatpush1.bf16.msra.mxu0 %v486
    %924 = vmatprep.subr.bf16.mxu0 0
    %925 = vmatpush1.bf16.msra.mxu0 %v487
    %926 = vmatprep.subr.bf16.mxu0 0
    %927 = vmatpush1.bf16.msra.mxu0 0
    %928 = vmatprep.subr.bf16.mxu0 0
    %929 = vmatpush1.bf16.msra.mxu0 0
    %930 = vmatprep.subr.bf16.mxu0 0
    %931 = vmatpush1.bf16.msra.mxu0 0
    %932 = vmatprep.subr.bf16.mxu0 0
    %933 = vmatpush1.bf16.msra.mxu0 0
    %934 = vmatprep.subr.bf16.mxu0 0
    %935 = vmatpush1.bf16.msra.mxu0 0
    %936 = vmatprep.subr.bf16.mxu0 0
    %937 = vmatpush1.bf16.msra.mxu0 0
    %938 = vmatprep.subr.bf16.mxu0 0
    %939 = vmatpush1.bf16.msra.mxu0 0
    %940 = vmatprep.subr.bf16.mxu0 0
    %941 = vmatpush1.bf16.msra.mxu0 0
    %942 = vmatprep.subr.bf16.mxu0 0
    %943 = vmatpush1.bf16.msra.mxu0 0
    %944 = vmatprep.subr.bf16.mxu0 0
    %945 = vmatpush1.bf16.msra.mxu0 0
    %946 = vmatprep.subr.bf16.mxu0 0
    %947 = vmatpush1.bf16.msra.mxu0 0
    %948 = vmatprep.subr.bf16.mxu0 0
    %949 = vmatpush1.bf16.msra.mxu0 0
    %950 = vmatprep.subr.bf16.mxu0 0
    %951 = vmatpush1.bf16.msra.mxu0 0
    %952 = vmatprep.subr.bf16.mxu0 0
    %953 = vmatpush1.bf16.msra.mxu0 0
    %954 = vmatprep.mubr.bf16.mxu0 0
    %955 = vmatmul.mubr.bf16.gmra.mrb[0].mxu0 %v920
    %v956 = vpop.f32.mrb[0].mxu0
    %v957 = vadd.f32 0.0, %v956
    %v958 = vpop.f32.mrb[0].mxu0
    %v959 = vpop.f32.mrb[0].mxu0
    %v960 = vpop.f32.mrb[0].mxu0
    %961 = vdwg.mxu0
    %v962 = vadd.f32 %v370, %v957
    %v963 = vxor.u32 %v962, 2147483648
    %v964 = vmul.f32 %v963, 1.442695
    %v965 = vpow.pop %v964
    %v966 = vadd.f32 %v965, 1.0
    %v967 = vrcp.pop %v966
    %v968 = vmul.f32 1.0, %v967
    %v969 = vtanh.pop %v962
    %v970 = vmul.f32 %v968, %v836
    %972 = vrot.lane.b32.xlu0 %v969, 64
    %v973 = vpop.permute.xlu0 %972
    %v975 = vmul.f32 %v968, %v973
    %977 = vrot.lane.b32.xlu0 %v975, 32
    %v978 = vpop.permute.xlu0 %977
    %v980 = vadd.f32 %v970, %v978
    %v981 = vtanh.pop %v980
    %983 = vrot.lane.b32.xlu0 %v981, 64
    %v984 = vpop.permute.xlu0 %983
    %v986 = vmul.f32 %v968, %v984
    %v987 = vpack.c.bf16 %v914, %v914
    %989 = vrot.lane.b32.xlu0 %v987, 32
    %v990 = vpop.permute.xlu0 %989
    %v992 = vsel %vm409, %v990, 0
    %994 = vmatprep.subr.bf16.mxu0 0
    %995 = vmatpush1.bf16.msra.mxu0 %v405
    %996 = vmatprep.subr.bf16.mxu0 0
    %997 = vmatpush1.bf16.msra.mxu0 %v406
    %998 = vmatprep.subr.bf16.mxu0 0
    %999 = vmatpush1.bf16.msra.mxu0 0
    %1000 = vmatprep.subr.bf16.mxu0 0
    %1001 = vmatpush1.bf16.msra.mxu0 0
    %1002 = vmatprep.subr.bf16.mxu0 0
    %1003 = vmatpush1.bf16.msra.mxu0 0
    %1004 = vmatprep.subr.bf16.mxu0 0
    %1005 = vmatpush1.bf16.msra.mxu0 0
    %1006 = vmatprep.subr.bf16.mxu0 0
    %1007 = vmatpush1.bf16.msra.mxu0 0
    %1008 = vmatprep.subr.bf16.mxu0 0
    %1009 = vmatpush1.bf16.msra.mxu0 0
    %1010 = vmatprep.subr.bf16.mxu0 0
    %1011 = vmatpush1.bf16.msra.mxu0 0
    %1012 = vmatprep.subr.bf16.mxu0 0
    %1013 = vmatpush1.bf16.msra.mxu0 0
    %1014 = vmatprep.subr.bf16.mxu0 0
    %1015 = vmatpush1.bf16.msra.mxu0 0
    %1016 = vmatprep.subr.bf16.mxu0 0
    %1017 = vmatpush1.bf16.msra.mxu0 0
    %1018 = vmatprep.subr.bf16.mxu0 0
    %1019 = vmatpush1.bf16.msra.mxu0 0
    %1020 = vmatprep.subr.bf16.mxu0 0
    %1021 = vmatpush1.bf16.msra.mxu0 0
    %1022 = vmatprep.subr.bf16.mxu0 0
    %1023 = vmatpush1.bf16.msra.mxu0 0
    %1024 = vmatprep.subr.bf16.mxu0 0
    %1025 = vmatpush1.bf16.msra.mxu0 0
    %1026 = vmatprep.mubr.bf16.mxu0 0
    %1027 = vmatmul.mubr.bf16.gmra.mrb[0].mxu0 %v992
    %v1028 = vpop.f32.mrb[0].mxu0
    %v1029 = vadd.f32 0.0, %v1028
    %v1030 = vpop.f32.mrb[0].mxu0
    %v1031 = vpop.f32.mrb[0].mxu0
    %v1032 = vpop.f32.mrb[0].mxu0
    %1033 = vdwg.mxu0
    %v1034 = vadd.f32 %v231, %v1029
    %v1035 = vxor.u32 %v1034, 2147483648
    %v1036 = vmul.f32 %v1035, 1.442695
    %v1037 = vpow.pop %v1036
    %v1038 = vadd.f32 %v1037, 1.0
    %v1039 = vrcp.pop %v1038
    %v1040 = vmul.f32 1.0, %v1039
    %v1041 = vtanh.pop %v1034
    %v1042 = vmul.f32 %v1040, %v908
    %1044 = vrot.lane.b32.xlu0 %v1041, 64
    %v1045 = vpop.permute.xlu0 %1044
    %v1047 = vmul.f32 %v1040, %v1045
    %1049 = vrot.lane.b32.xlu0 %v1047, 32
    %v1050 = vpop.permute.xlu0 %1049
    %v1052 = vadd.f32 %v1042, %v1050
    %v1053 = vtanh.pop %v1052
    %1055 = vrot.lane.b32.xlu0 %v1053, 64
    %v1056 = vpop.permute.xlu0 %1055
    %v1058 = vmul.f32 %v1040, %v1056
    %v1059 = vpack.c.bf16 %v986, %v986
    %1061 = vrot.lane.b32.xlu0 %v1059, 32
    %v1062 = vpop.permute.xlu0 %1061
    %v1064 = vsel %vm409, %v1062, 0
    %1066 = vmatprep.subr.bf16.mxu0 0
    %1067 = vmatpush1.bf16.msra.mxu0 %v486
    %1068 = vmatprep.subr.bf16.mxu0 0
    %1069 = vmatpush1.bf16.msra.mxu0 %v487
    %1070 = vmatprep.subr.bf16.mxu0 0
    %1071 = vmatpush1.bf16.msra.mxu0 0
    %1072 = vmatprep.subr.bf16.mxu0 0
    %1073 = vmatpush1.bf16.msra.mxu0 0
    %1074 = vmatprep.subr.bf16.mxu0 0
    %1075 = vmatpush1.bf16.msra.mxu0 0
    %1076 = vmatprep.subr.bf16.mxu0 0
    %1077 = vmatpush1.bf16.msra.mxu0 0
    %1078 = vmatprep.subr.bf16.mxu0 0
    %1079 = vmatpush1.bf16.msra.mxu0 0
    %1080 = vmatprep.subr.bf16.mxu0 0
    %1081 = vmatpush1.bf16.msra.mxu0 0
    %1082 = vmatprep.subr.bf16.mxu0 0
    %1083 = vmatpush1.bf16.msra.mxu0 0
    %1084 = vmatprep.subr.bf16.mxu0 0
    %1085 = vmatpush1.bf16.msra.mxu0 0
    %1086 = vmatprep.subr.bf16.mxu0 0
    %1087 = vmatpush1.bf16.msra.mxu0 0
    %1088 = vmatprep.subr.bf16.mxu0 0
    %1089 = vmatpush1.bf16.msra.mxu0 0
    %1090 = vmatprep.subr.bf16.mxu0 0
    %1091 = vmatpush1.bf16.msra.mxu0 0
    %1092 = vmatprep.subr.bf16.mxu0 0
    %1093 = vmatpush1.bf16.msra.mxu0 0
    %1094 = vmatprep.subr.bf16.mxu0 0
    %1095 = vmatpush1.bf16.msra.mxu0 0
    %1096 = vmatprep.subr.bf16.mxu0 0
    %1097 = vmatpush1.bf16.msra.mxu0 0
    %1098 = vmatprep.mubr.bf16.mxu0 0
    %1099 = vmatmul.mubr.bf16.gmra.mrb[0].mxu0 %v1064
    %v1100 = vpop.f32.mrb[0].mxu0
    %v1101 = vadd.f32 0.0, %v1100
    %v1102 = vpop.f32.mrb[0].mxu0
    %v1103 = vpop.f32.mrb[0].mxu0
    %v1104 = vpop.f32.mrb[0].mxu0
    %1105 = vdwg.mxu0
    %v1106 = vadd.f32 %v375, %v1101
    %v1107 = vxor.u32 %v1106, 2147483648
    %v1108 = vmul.f32 %v1107, 1.442695
    %v1109 = vpow.pop %v1108
    %v1110 = vadd.f32 %v1109, 1.0
    %v1111 = vrcp.pop %v1110
    %v1112 = vmul.f32 1.0, %v1111
    %v1113 = vtanh.pop %v1106
    %v1114 = vmul.f32 %v1112, %v980
    %1116 = vrot.lane.b32.xlu0 %v1113, 64
    %v1117 = vpop.permute.xlu0 %1116
    %v1119 = vmul.f32 %v1112, %v1117
    %1121 = vrot.lane.b32.xlu0 %v1119, 32
    %v1122 = vpop.permute.xlu0 %1121
    %v1124 = vadd.f32 %v1114, %v1122
    %v1125 = vtanh.pop %v1124
    %1127 = vrot.lane.b32.xlu0 %v1125, 64
    %v1128 = vpop.permute.xlu0 %1127
    %v1130 = vmul.f32 %v1112, %v1128
    %v1131 = vpack.c.bf16 %v1058, %v1058
    %1133 = vrot.lane.b32.xlu0 %v1131, 32
    %v1134 = vpop.permute.xlu0 %1133
    %v1136 = vsel %vm409, %v1134, 0
    %1138 = vmatprep.subr.bf16.mxu0 0
    %1139 = vmatpush1.bf16.msra.mxu0 %v405
    %1140 = vmatprep.subr.bf16.mxu0 0
    %1141 = vmatpush1.bf16.msra.mxu0 %v406
    %1142 = vmatprep.subr.bf16.mxu0 0
    %1143 = vmatpush1.bf16.msra.mxu0 0
    %1144 = vmatprep.subr.bf16.mxu0 0
    %1145 = vmatpush1.bf16.msra.mxu0 0
    %1146 = vmatprep.subr.bf16.mxu0 0
    %1147 = vmatpush1.bf16.msra.mxu0 0
    %1148 = vmatprep.subr.bf16.mxu0 0
    %1149 = vmatpush1.bf16.msra.mxu0 0
    %1150 = vmatprep.subr.bf16.mxu0 0
    %1151 = vmatpush1.bf16.msra.mxu0 0
    %1152 = vmatprep.subr.bf16.mxu0 0
    %1153 = vmatpush1.bf16.msra.mxu0 0
    %1154 = vmatprep.subr.bf16.mxu0 0
    %1155 = vmatpush1.bf16.msra.mxu0 0
    %1156 = vmatprep.subr.bf16.mxu0 0
    %1157 = vmatpush1.bf16.msra.mxu0 0
    %1158 = vmatprep.subr.bf16.mxu0 0
    %1159 = vmatpush1.bf16.msra.mxu0 0
    %1160 = vmatprep.subr.bf16.mxu0 0
    %1161 = vmatpush1.bf16.msra.mxu0 0
    %1162 = vmatprep.subr.bf16.mxu0 0
    %1163 = vmatpush1.bf16.msra.mxu0 0
    %1164 = vmatprep.subr.bf16.mxu0 0
    %1165 = vmatpush1.bf16.msra.mxu0 0
    %1166 = vmatprep.subr.bf16.mxu0 0
    %1167 = vmatpush1.bf16.msra.mxu0 0
    %1168 = vmatprep.subr.bf16.mxu0 0
    %1169 = vmatpush1.bf16.msra.mxu0 0
    %1170 = vmatprep.mubr.bf16.mxu0 0
    %1171 = vmatmul.mubr.bf16.gmra.mrb[0].mxu0 %v1136
    %v1172 = vpop.f32.mrb[0].mxu0
    %v1173 = vadd.f32 0.0, %v1172
    %v1174 = vpop.f32.mrb[0].mxu0
    %v1175 = vpop.f32.mrb[0].mxu0
    %v1176 = vpop.f32.mrb[0].mxu0
    %1177 = vdwg.mxu0
    %v1178 = vadd.f32 %v234, %v1173
    %v1179 = vxor.u32 %v1178, 2147483648
    %v1180 = vmul.f32 %v1179, 1.442695
    %v1181 = vpow.pop %v1180
    %v1182 = vadd.f32 %v1181, 1.0
    %v1183 = vrcp.pop %v1182
    %v1184 = vmul.f32 1.0, %v1183
    %v1185 = vtanh.pop %v1178
    %v1186 = vmul.f32 %v1184, %v1052
    %1188 = vrot.lane.b32.xlu0 %v1185, 64
    %v1189 = vpop.permute.xlu0 %1188
    %v1191 = vmul.f32 %v1184, %v1189
    %1193 = vrot.lane.b32.xlu0 %v1191, 32
    %v1194 = vpop.permute.xlu0 %1193
    %v1196 = vadd.f32 %v1186, %v1194
    %v1197 = vtanh.pop %v1196
    %1199 = vrot.lane.b32.xlu0 %v1197, 64
    %v1200 = vpop.permute.xlu0 %1199
    %v1202 = vmul.f32 %v1184, %v1200
    %v1203 = vpack.c.bf16 %v1130, %v1130
    %1205 = vrot.lane.b32.xlu0 %v1203, 32
    %v1206 = vpop.permute.xlu0 %1205
    %v1208 = vsel %vm409, %v1206, 0
    %1210 = vmatprep.subr.bf16.mxu0 0
    %1211 = vmatpush1.bf16.msra.mxu0 %v486
    %1212 = vmatprep.subr.bf16.mxu0 0
    %1213 = vmatpush1.bf16.msra.mxu0 %v487
    %1214 = vmatprep.subr.bf16.mxu0 0
    %1215 = vmatpush1.bf16.msra.mxu0 0
    %1216 = vmatprep.subr.bf16.mxu0 0
    %1217 = vmatpush1.bf16.msra.mxu0 0
    %1218 = vmatprep.subr.bf16.mxu0 0
    %1219 = vmatpush1.bf16.msra.mxu0 0
    %1220 = vmatprep.subr.bf16.mxu0 0
    %1221 = vmatpush1.bf16.msra.mxu0 0
    %1222 = vmatprep.subr.bf16.mxu0 0
    %1223 = vmatpush1.bf16.msra.mxu0 0
    %1224 = vmatprep.subr.bf16.mxu0 0
    %1225 = vmatpush1.bf16.msra.mxu0 0
    %1226 = vmatprep.subr.bf16.mxu0 0
    %1227 = vmatpush1.bf16.msra.mxu0 0
    %1228 = vmatprep.subr.bf16.mxu0 0
    %1229 = vmatpush1.bf16.msra.mxu0 0
    %1230 = vmatprep.subr.bf16.mxu0 0
    %1231 = vmatpush1.bf16.msra.mxu0 0
    %1232 = vmatprep.subr.bf16.mxu0 0
    %1233 = vmatpush1.bf16.msra.mxu0 0
    %1234 = vmatprep.subr.bf16.mxu0 0
    %1235 = vmatpush1.bf16.msra.mxu0 0
    %1236 = vmatprep.subr.bf16.mxu0 0
    %1237 = vmatpush1.bf16.msra.mxu0 0
    %1238 = vmatprep.subr.bf16.mxu0 0
    %1239 = vmatpush1.bf16.msra.mxu0 0
    %1240 = vmatprep.subr.bf16.mxu0 0
    %1241 = vmatpush1.bf16.msra.mxu0 0
    %1242 = vmatprep.mubr.bf16.mxu0 0
    %1243 = vmatmul.mubr.bf16.gmra.mrb[0].mxu0 %v1208
    %v1244 = vpop.f32.mrb[0].mxu0
    %v1245 = vadd.f32 0.0, %v1244
    %v1246 = vpop.f32.mrb[0].mxu0
    %v1247 = vpop.f32.mrb[0].mxu0
    %v1248 = vpop.f32.mrb[0].mxu0
    %1249 = vdwg.mxu0
    %v1250 = vadd.f32 %v378, %v1245
    %v1251 = vxor.u32 %v1250, 2147483648
    %v1252 = vmul.f32 %v1251, 1.442695
    %v1253 = vpow.pop %v1252
    %v1254 = vadd.f32 %v1253, 1.0
    %v1255 = vrcp.pop %v1254
    %v1256 = vmul.f32 1.0, %v1255
    %v1257 = vtanh.pop %v1250
    %v1258 = vmul.f32 %v1256, %v1124
    %1260 = vrot.lane.b32.xlu0 %v1257, 64
    %v1261 = vpop.permute.xlu0 %1260
    %v1263 = vmul.f32 %v1256, %v1261
    %1265 = vrot.lane.b32.xlu0 %v1263, 32
    %v1266 = vpop.permute.xlu0 %1265
    %v1268 = vadd.f32 %v1258, %v1266
    %v1269 = vtanh.pop %v1268
    %1271 = vrot.lane.b32.xlu0 %v1269, 64
    %v1272 = vpop.permute.xlu0 %1271
    %v1274 = vmul.f32 %v1256, %v1272
    %v1275 = vpack.c.bf16 %v1202, %v1202
    %1277 = vrot.lane.b32.xlu0 %v1275, 32
    %v1278 = vpop.permute.xlu0 %1277
    %v1280 = vsel %vm409, %v1278, 0
    %1282 = vmatprep.subr.bf16.mxu0 0
    %1283 = vmatpush1.bf16.msra.mxu0 %v405
    %1284 = vmatprep.subr.bf16.mxu0 0
    %1285 = vmatpush1.bf16.msra.mxu0 %v406
    %1286 = vmatprep.subr.bf16.mxu0 0
    %1287 = vmatpush1.bf16.msra.mxu0 0
    %1288 = vmatprep.subr.bf16.mxu0 0
    %1289 = vmatpush1.bf16.msra.mxu0 0
    %1290 = vmatprep.subr.bf16.mxu0 0
    %1291 = vmatpush1.bf16.msra.mxu0 0
    %1292 = vmatprep.subr.bf16.mxu0 0
    %1293 = vmatpush1.bf16.msra.mxu0 0
    %1294 = vmatprep.subr.bf16.mxu0 0
    %1295 = vmatpush1.bf16.msra.mxu0 0
    %1296 = vmatprep.subr.bf16.mxu0 0
    %1297 = vmatpush1.bf16.msra.mxu0 0
    %1298 = vmatprep.subr.bf16.mxu0 0
    %1299 = vmatpush1.bf16.msra.mxu0 0
    %1300 = vmatprep.subr.bf16.mxu0 0
    %1301 = vmatpush1.bf16.msra.mxu0 0
    %1302 = vmatprep.subr.bf16.mxu0 0
    %1303 = vmatpush1.bf16.msra.mxu0 0
    %1304 = vmatprep.subr.bf16.mxu0 0
    %1305 = vmatpush1.bf16.msra.mxu0 0
    %1306 = vmatprep.subr.bf16.mxu0 0
    %1307 = vmatpush1.bf16.msra.mxu0 0
    %1308 = vmatprep.subr.bf16.mxu0 0
    %1309 = vmatpush1.bf16.msra.mxu0 0
    %1310 = vmatprep.subr.bf16.mxu0 0
    %1311 = vmatpush1.bf16.msra.mxu0 0
    %1312 = vmatprep.subr.bf16.mxu0 0
    %1313 = vmatpush1.bf16.msra.mxu0 0
    %1314 = vmatprep.mubr.bf16.mxu0 0
    %1315 = vmatmul.mubr.bf16.gmra.mrb[0].mxu0 %v1280
    %v1316 = vpop.f32.mrb[0].mxu0
    %v1317 = vadd.f32 0.0, %v1316
    %v1318 = vpop.f32.mrb[0].mxu0
    %v1319 = vpop.f32.mrb[0].mxu0
    %v1320 = vpop.f32.mrb[0].mxu0
    %1321 = vdwg.mxu0
    %v1322 = vadd.f32 %v239, %v1317
    %v1323 = vxor.u32 %v1322, 2147483648
    %v1324 = vmul.f32 %v1323, 1.442695
    %v1325 = vpow.pop %v1324
    %v1326 = vadd.f32 %v1325, 1.0
    %v1327 = vrcp.pop %v1326
    %v1328 = vmul.f32 1.0, %v1327
    %v1329 = vtanh.pop %v1322
    %v1330 = vmul.f32 %v1328, %v1196
    %1332 = vrot.lane.b32.xlu0 %v1329, 64
    %v1333 = vpop.permute.xlu0 %1332
    %v1335 = vmul.f32 %v1328, %v1333
    %1337 = vrot.lane.b32.xlu0 %v1335, 32
    %v1338 = vpop.permute.xlu0 %1337
    %v1340 = vadd.f32 %v1330, %v1338
    %v1341 = vtanh.pop %v1340
    %1343 = vrot.lane.b32.xlu0 %v1341, 64
    %v1344 = vpop.permute.xlu0 %1343
    %v1346 = vmul.f32 %v1328, %v1344
    %v1347 = vpack.c.bf16 %v1274, %v1274
    %1349 = vrot.lane.b32.xlu0 %v1347, 32
    %v1350 = vpop.permute.xlu0 %1349
    %v1352 = vsel %vm409, %v1350, 0
    %1354 = vmatprep.subr.bf16.mxu0 0
    %1355 = vmatpush1.bf16.msra.mxu0 %v486
    %1356 = vmatprep.subr.bf16.mxu0 0
    %1357 = vmatpush1.bf16.msra.mxu0 %v487
    %1358 = vmatprep.subr.bf16.mxu0 0
    %1359 = vmatpush1.bf16.msra.mxu0 0
    %1360 = vmatprep.subr.bf16.mxu0 0
    %1361 = vmatpush1.bf16.msra.mxu0 0
    %1362 = vmatprep.subr.bf16.mxu0 0
    %1363 = vmatpush1.bf16.msra.mxu0 0
    %1364 = vmatprep.subr.bf16.mxu0 0
    %1365 = vmatpush1.bf16.msra.mxu0 0
    %1366 = vmatprep.subr.bf16.mxu0 0
    %1367 = vmatpush1.bf16.msra.mxu0 0
    %1368 = vmatprep.subr.bf16.mxu0 0
    %1369 = vmatpush1.bf16.msra.mxu0 0
    %1370 = vmatprep.subr.bf16.mxu0 0
    %1371 = vmatpush1.bf16.msra.mxu0 0
    %1372 = vmatprep.subr.bf16.mxu0 0
    %1373 = vmatpush1.bf16.msra.mxu0 0
    %1374 = vmatprep.subr.bf16.mxu0 0
    %1375 = vmatpush1.bf16.msra.mxu0 0
    %1376 = vmatprep.subr.bf16.mxu0 0
    %1377 = vmatpush1.bf16.msra.mxu0 0
    %1378 = vmatprep.subr.bf16.mxu0 0
    %1379 = vmatpush1.bf16.msra.mxu0 0
    %1380 = vmatprep.subr.bf16.mxu0 0
    %1381 = vmatpush1.bf16.msra.mxu0 0
    %1382 = vmatprep.subr.bf16.mxu0 0
    %1383 = vmatpush1.bf16.msra.mxu0 0
    %1384 = vmatprep.subr.bf16.mxu0 0
    %1385 = vmatpush1.bf16.msra.mxu0 0
    %1386 = vmatprep.mubr.bf16.mxu0 0
    %1387 = vmatmul.mubr.bf16.gmra.mrb[0].mxu0 %v1352
    %v1388 = vpop.f32.mrb[0].mxu0
    %v1389 = vadd.f32 0.0, %v1388
    %v1390 = vpop.f32.mrb[0].mxu0
    %v1391 = vpop.f32.mrb[0].mxu0
    %v1392 = vpop.f32.mrb[0].mxu0
    %1393 = vdwg.mxu0
    %v1394 = vadd.f32 %v383, %v1389
    %v1395 = vxor.u32 %v1394, 2147483648
    %v1396 = vmul.f32 %v1395, 1.442695
    %v1397 = vpow.pop %v1396
    %v1398 = vadd.f32 %v1397, 1.0
    %v1399 = vrcp.pop %v1398
    %v1400 = vmul.f32 1.0, %v1399
    %v1401 = vtanh.pop %v1394
    %v1402 = vmul.f32 %v1400, %v1268
    %1404 = vrot.lane.b32.xlu0 %v1401, 64
    %v1405 = vpop.permute.xlu0 %1404
    %v1407 = vmul.f32 %v1400, %v1405
    %1409 = vrot.lane.b32.xlu0 %v1407, 32
    %v1410 = vpop.permute.xlu0 %1409
    %v1412 = vadd.f32 %v1402, %v1410
    %v1413 = vtanh.pop %v1412
    %1415 = vrot.lane.b32.xlu0 %v1413, 64
    %v1416 = vpop.permute.xlu0 %1415
    %v1418 = vmul.f32 %v1400, %v1416
    %v1419 = vpack.c.bf16 %v1346, %v1346
    %1421 = vrot.lane.b32.xlu0 %v1419, 32
    %v1422 = vpop.permute.xlu0 %1421
    %v1424 = vsel %vm409, %v1422, 0
    %1426 = vmatprep.subr.bf16.mxu0 0
    %1427 = vmatpush1.bf16.msra.mxu0 %v405
    %1428 = vmatprep.subr.bf16.mxu0 0
    %1429 = vmatpush1.bf16.msra.mxu0 %v406
    %1430 = vmatprep.subr.bf16.mxu0 0
    %1431 = vmatpush1.bf16.msra.mxu0 0
    %1432 = vmatprep.subr.bf16.mxu0 0
    %1433 = vmatpush1.bf16.msra.mxu0 0
    %1434 = vmatprep.subr.bf16.mxu0 0
    %1435 = vmatpush1.bf16.msra.mxu0 0
    %1436 = vmatprep.subr.bf16.mxu0 0
    %1437 = vmatpush1.bf16.msra.mxu0 0
    %1438 = vmatprep.subr.bf16.mxu0 0
    %1439 = vmatpush1.bf16.msra.mxu0 0
    %1440 = vmatprep.subr.bf16.mxu0 0
    %1441 = vmatpush1.bf16.msra.mxu0 0
    %1442 = vmatprep.subr.bf16.mxu0 0
    %1443 = vmatpush1.bf16.msra.mxu0 0
    %1444 = vmatprep.subr.bf16.mxu0 0
    %1445 = vmatpush1.bf16.msra.mxu0 0
    %1446 = vmatprep.subr.bf16.mxu0 0
    %1447 = vmatpush1.bf16.msra.mxu0 0
    %1448 = vmatprep.subr.bf16.mxu0 0
    %1449 = vmatpush1.bf16.msra.mxu0 0
    %1450 = vmatprep.subr.bf16.mxu0 0
    %1451 = vmatpush1.bf16.msra.mxu0 0
    %1452 = vmatprep.subr.bf16.mxu0 0
    %1453 = vmatpush1.bf16.msra.mxu0 0
    %1454 = vmatprep.subr.bf16.mxu0 0
    %1455 = vmatpush1.bf16.msra.mxu0 0
    %1456 = vmatprep.subr.bf16.mxu0 0
    %1457 = vmatpush1.bf16.msra.mxu0 0
    %1458 = vmatprep.mubr.bf16.mxu0 0
    %1459 = vmatmul.mubr.bf16.gmra.mrb[0].mxu0 %v1424
    %v1460 = vpop.f32.mrb[0].mxu0
    %v1461 = vadd.f32 0.0, %v1460
    %v1462 = vpop.f32.mrb[0].mxu0
    %v1463 = vpop.f32.mrb[0].mxu0
    %v1464 = vpop.f32.mrb[0].mxu0
    %1465 = vdwg.mxu0
    %v1466 = vadd.f32 %v242, %v1461
    %v1467 = vxor.u32 %v1466, 2147483648
    %v1468 = vmul.f32 %v1467, 1.442695
    %v1469 = vpow.pop %v1468
    %v1470 = vadd.f32 %v1469, 1.0
    %v1471 = vrcp.pop %v1470
    %v1472 = vmul.f32 1.0, %v1471
    %v1473 = vtanh.pop %v1466
    %v1474 = vmul.f32 %v1472, %v1340
    %1476 = vrot.lane.b32.xlu0 %v1473, 64
    %v1477 = vpop.permute.xlu0 %1476
    %v1479 = vmul.f32 %v1472, %v1477
    %1481 = vrot.lane.b32.xlu0 %v1479, 32
    %v1482 = vpop.permute.xlu0 %1481
    %v1484 = vadd.f32 %v1474, %v1482
    %v1485 = vtanh.pop %v1484
    %1487 = vrot.lane.b32.xlu0 %v1485, 64
    %v1488 = vpop.permute.xlu0 %1487
    %v1490 = vmul.f32 %v1472, %v1488
    %v1491 = vpack.c.bf16 %v1418, %v1418
    %1493 = vrot.lane.b32.xlu0 %v1491, 32
    %v1494 = vpop.permute.xlu0 %1493
    %v1496 = vsel %vm409, %v1494, 0
    %1498 = vmatprep.subr.bf16.mxu0 0
    %1499 = vmatpush1.bf16.msra.mxu0 %v486
    %1500 = vmatprep.subr.bf16.mxu0 0
    %1501 = vmatpush1.bf16.msra.mxu0 %v487
    %1502 = vmatprep.subr.bf16.mxu0 0
    %1503 = vmatpush1.bf16.msra.mxu0 0
    %1504 = vmatprep.subr.bf16.mxu0 0
    %1505 = vmatpush1.bf16.msra.mxu0 0
    %1506 = vmatprep.subr.bf16.mxu0 0
    %1507 = vmatpush1.bf16.msra.mxu0 0
    %1508 = vmatprep.subr.bf16.mxu0 0
    %1509 = vmatpush1.bf16.msra.mxu0 0
    %1510 = vmatprep.subr.bf16.mxu0 0
    %1511 = vmatpush1.bf16.msra.mxu0 0
    %1512 = vmatprep.subr.bf16.mxu0 0
    %1513 = vmatpush1.bf16.msra.mxu0 0
    %1514 = vmatprep.subr.bf16.mxu0 0
    %1515 = vmatpush1.bf16.msra.mxu0 0
    %1516 = vmatprep.subr.bf16.mxu0 0
    %1517 = vmatpush1.bf16.msra.mxu0 0
    %1518 = vmatprep.subr.bf16.mxu0 0
    %1519 = vmatpush1.bf16.msra.mxu0 0
    %1520 = vmatprep.subr.bf16.mxu0 0
    %1521 = vmatpush1.bf16.msra.mxu0 0
    %1522 = vmatprep.subr.bf16.mxu0 0
    %1523 = vmatpush1.bf16.msra.mxu0 0
    %1524 = vmatprep.subr.bf16.mxu0 0
    %1525 = vmatpush1.bf16.msra.mxu0 0
    %1526 = vmatprep.subr.bf16.mxu0 0
    %1527 = vmatpush1.bf16.msra.mxu0 0
    %1528 = vmatprep.subr.bf16.mxu0 0
    %1529 = vmatpush1.bf16.msra.mxu0 0
    %1530 = vmatprep.mubr.bf16.mxu0 0
    %1531 = vmatmul.mubr.bf16.gmra.mrb[0].mxu0 %v1496
    %v1532 = vpop.f32.mrb[0].mxu0
    %v1533 = vadd.f32 0.0, %v1532
    %v1534 = vpop.f32.mrb[0].mxu0
    %v1535 = vpop.f32.mrb[0].mxu0
    %v1536 = vpop.f32.mrb[0].mxu0
    %1537 = vdwg.mxu0
    %v1538 = vadd.f32 %v386, %v1533
    %v1539 = vxor.u32 %v1538, 2147483648
    %v1540 = vmul.f32 %v1539, 1.442695
    %v1541 = vpow.pop %v1540
    %v1542 = vadd.f32 %v1541, 1.0
    %v1543 = vrcp.pop %v1542
    %v1544 = vmul.f32 1.0, %v1543
    %v1545 = vtanh.pop %v1538
    %v1546 = vmul.f32 %v1544, %v1412
    %1548 = vrot.lane.b32.xlu0 %v1545, 64
    %v1549 = vpop.permute.xlu0 %1548
    %v1551 = vmul.f32 %v1544, %v1549
    %1553 = vrot.lane.b32.xlu0 %v1551, 32
    %v1554 = vpop.permute.xlu0 %1553
    %v1556 = vadd.f32 %v1546, %v1554
    %v1557 = vtanh.pop %v1556
    %1559 = vrot.lane.b32.xlu0 %v1557, 64
    %v1560 = vpop.permute.xlu0 %1559
    %v1562 = vmul.f32 %v1544, %v1560
    %1571 = vrot.lane.b32.xlu0 %v477, 32
    %v1572 = vpop.permute.xlu0 %1571
    %1573 = vrot.lane.b32.xlu0 %v626, 32
    %v1574 = vpop.permute.xlu0 %1573
    %1575 = vrot.lane.b32.xlu0 %v770, 32
    %v1576 = vpop.permute.xlu0 %1575
    %1577 = vrot.lane.b32.xlu0 %v914, 32
    %v1578 = vpop.permute.xlu0 %1577
    %1579 = vrot.lane.b32.xlu0 %v1058, 32
    %v1580 = vpop.permute.xlu0 %1579
    %1581 = vrot.lane.b32.xlu0 %v1202, 32
    %v1582 = vpop.permute.xlu0 %1581
    %1583 = vrot.lane.b32.xlu0 %v1346, 32
    %v1584 = vpop.permute.xlu0 %1583
    %1585 = vrot.lane.b32.xlu0 %v1490, 32
    %v1586 = vpop.permute.xlu0 %1585
    %1595 = vst.msk [vmem:[%s8] sm:$0xff] %vm409, %v1572
    %1596 = vst.msk [vmem:[%s8 + $0x8] sm:$0xff] %vm409, %v1574
    %1597 = vst.msk [vmem:[%s8 + $0x10] sm:$0xff] %vm409, %v1576
    %1598 = vst.msk [vmem:[%s8 + $0x18] sm:$0xff] %vm409, %v1578
    %1599 = vst.msk [vmem:[%s8 + $0x20] sm:$0xff] %vm409, %v1580
    %1600 = vst.msk [vmem:[%s8 + $0x28] sm:$0xff] %vm409, %v1582
    %1601 = vst.msk [vmem:[%s8 + $0x30] sm:$0xff] %vm409, %v1584
    %1602 = vst.msk [vmem:[%s8 + $0x38] sm:$0xff] %vm409, %v1586
    %1611 = vrot.lane.b32.xlu0 %v554, 32
    %v1612 = vpop.permute.xlu0 %1611
    %1613 = vrot.lane.b32.xlu0 %v698, 32
    %v1614 = vpop.permute.xlu0 %1613
    %1615 = vrot.lane.b32.xlu0 %v842, 32
    %v1616 = vpop.permute.xlu0 %1615
    %1617 = vrot.lane.b32.xlu0 %v986, 32
    %v1618 = vpop.permute.xlu0 %1617
    %1619 = vrot.lane.b32.xlu0 %v1130, 32
    %v1620 = vpop.permute.xlu0 %1619
    %1621 = vrot.lane.b32.xlu0 %v1274, 32
    %v1622 = vpop.permute.xlu0 %1621
    %1623 = vrot.lane.b32.xlu0 %v1418, 32
    %v1624 = vpop.permute.xlu0 %1623
    %1625 = vrot.lane.b32.xlu0 %v1562, 32
    %v1626 = vpop.permute.xlu0 %1625
    %1635 = vst.msk [vmem:[%s9] sm:$0xff] %vm409, %v1612
    %1636 = vst.msk [vmem:[%s9 + $0x8] sm:$0xff] %vm409, %v1614
    %1637 = vst.msk [vmem:[%s9 + $0x10] sm:$0xff] %vm409, %v1616
    %1638 = vst.msk [vmem:[%s9 + $0x18] sm:$0xff] %vm409, %v1618
    %1639 = vst.msk [vmem:[%s9 + $0x20] sm:$0xff] %vm409, %v1620
    %1640 = vst.msk [vmem:[%s9 + $0x28] sm:$0xff] %vm409, %v1622
    %1641 = vst.msk [vmem:[%s9 + $0x30] sm:$0xff] %vm409, %v1624
    %1642 = vst.msk [vmem:[%s9 + $0x38] sm:$0xff] %vm409, %v1626
    // Predicated region
    $region54: #{tpu_custom_call.1} parent=1 // pred_check
      _
    $region55: #{tpu_custom_call.1} parent=1 // pred_check_branch
      %1644 = sbr.rel (0) target = $region57
    $region56: #{tpu_custom_call.1} parent=1 // pred_region
      _
    $region57: #{tpu_custom_call.1} parent=1 // pred_fallthru
      _
    // Predicated region
    $region58: #{tpu_custom_call.1} parent=1 // pred_check
      _
    $region59: #{tpu_custom_call.1} parent=1 // pred_check_branch
      %1646 = sbr.rel (0) target = $region61
    $region60: #{tpu_custom_call.1} parent=1 // pred_region
      _
    $region61: #{tpu_custom_call.1} parent=1 // pred_fallthru
      _
    // Predicated region
    $region62: #{tpu_custom_call.1} parent=1 // pred_check
      _
    $region63: #{tpu_custom_call.1} parent=1 // pred_check_branch
      %1648 = sbr.rel (0) target = $region65
    $region64: #{tpu_custom_call.1} parent=1 // pred_region
      _
    $region65: #{tpu_custom_call.1} parent=1 // pred_fallthru
      _
    // Predicated region
    $region66: #{tpu_custom_call.1} parent=1 // pred_check
      _
    $region67: #{tpu_custom_call.1} parent=1 // pred_check_branch
      %1650 = sbr.rel (0) target = $region69
    $region68: #{tpu_custom_call.1} parent=1 // pred_region
      _
    $region69: #{tpu_custom_call.1} parent=1 // pred_fallthru
      _
    %1651 = vsyncpa [#allocation3], 1
    %1652 = vsyncpa [#allocation5], 1
    %1653 = vsyncpa [#allocation8], 1

</llo_original>
